<compile_context>
chip_gen: v5e
topology: v5e:2x2
jax: 0.10.0
libtpu: 0.0.40
codegen_flags: <defaults>
</compile_context>

<pallas_src>
import math

import jax
import jax.numpy as jnp
from jax.experimental import pallas as pl
from jax.experimental.pallas import tpu as pltpu

H = 64  # embedding_dim = h_dim = 64 (module defaults)


def _vmem_spec():
    return pl.BlockSpec(memory_space=pltpu.MemorySpace.VMEM)


# ---------------------------------------------------------------------------
# Fused kernel: speed_embedding + LSTM + pairwise spatial MLP head.
# ---------------------------------------------------------------------------
def _fused_kernel(x_ref, lp_ref, wspd_ref, bspd_ref, wih_ref, whh_ref, blstm_ref,
                  wsp_ref, w1a_ref, w1b_ref, c1_ref, w2t_ref, b2_ref,
                  w3_ref, b3_ref, w4_ref, b4_ref,
                  te_ref, node_rep_ref):
    f32, bf16 = jnp.float32, jnp.bfloat16
    B = lp_ref.shape[0]
    steps = x_ref.shape[0] // B          # == time_length (2)

    # ---- speed_embedding (Linear(2,64)) fused with the single-layer LSTM ----
    # K=2 "matmul" on the VPU: x0*W_row0 + x1*W_row1 + b (no MXU fill/drain).
    w_s0 = wspd_ref[0:1, :]
    w_s1 = wspd_ref[1:2, :]
    bspd = bspd_ref[...]
    wih = wih_ref[...]                    # (H, 4H) bf16, PyTorch gate order [i|f|g|o]
    whh = whh_ref[...]                    # (H, 4H) bf16
    blstm = blstm_ref[...]                # (1, 4H) f32 = b_ih + b_hh

    h = None
    c = None
    for t in range(steps):                # static unroll (steps == 2)
        xt = x_ref[t * B:(t + 1) * B, :]                                 # (B, 2)
        emb = xt[:, 0:1] * w_s0 + xt[:, 1:2] * w_s1 + bspd               # (B, H)  VPU
        gates = jnp.dot(emb.astype(bf16), wih,
                        preferred_element_type=f32) + blstm              # (B, 4H) MXU
        if t > 0:
            gates = gates + jnp.dot(h.astype(bf16), whh,
                                    preferred_element_type=f32)
        # PyTorch gate layout already puts the two sigmoid gates i|f in lanes
        # 0:127, so one full-slab sigmoid covers both (3 EUP ops per step).
        g = jnp.tanh(gates[:, 2 * H:3 * H])
        o = jax.nn.sigmoid(gates[:, 3 * H:4 * H])
        if t == 0:                        # zero initial state: f*c == 0, h@whh == 0
            i = jax.nn.sigmoid(gates[:, 0:H])
            c = i * g
        else:
            s_if = jax.nn.sigmoid(gates[:, 0:2 * H])
            i, f = s_if[:, :H], s_if[:, H:]
            c = f * c + i * g
        h = o * jnp.tanh(c)
    node = h                              # (B, H) == lstm output[-1]; never leaves VMEM

    # ---- pairwise relative-position MLP head -------------------------------
    # h1_pre[a*B+b] = spatial(lp[b]-lp[a]) @ W1a + node[b] @ W1b + b1
    #             = (lp[b]@WspT)@W1a + node[b]@W1b + (bsp@W1a + b1) - (lp[a]@WspT)@W1a
    #             = P[b] - Q[a]
    # so every matmul runs at B rows (not B*B) and the B*B outer difference is
    # built by in-kernel broadcasting — no tile/repeat arrays in HBM.
    lp = lp_ref[...]                                                     # (B, 2)
    sa = lp[:, 0:1] * wsp_ref[0:1, :] + lp[:, 1:2] * wsp_ref[1:2, :]     # (B, H)  VPU
    sw = jnp.dot(sa.astype(bf16), w1a_ref[...], preferred_element_type=f32)
    nb = jnp.dot(node.astype(bf16), w1b_ref[...], preferred_element_type=f32)
    p = sw + nb + c1_ref[...]             # c1 = spatial_b @ W1a + b1 (folded at prep time)
    q = sw

    w2t = w2t_ref[...]
    b2 = b2_ref[...]
    b4 = b4_ref[...]
    n_h3 = w3_ref.shape[0]                # == 4
    w3_rows = [w3_ref[j:j + 1, :] for j in range(n_h3)]     # hoisted out of the a-loop
    b3_j = [b3_ref[:, j:j + 1] for j in range(n_h3)]
    w4_j = [w4_ref[:, j:j + 1] for j in range(n_h3)]
    zero_col = jnp.zeros((B, 1), f32)

    for a in range(B):                    # static unroll; output rows k = a*B + b
        h1 = jnp.maximum(p - q[a:a + 1, :], 0.0)                         # (B, H)
        h2 = jnp.maximum(jnp.dot(h1.astype(bf16), w2t,
                                 preferred_element_type=f32) + b2, 0.0)  # (B, 16) MXU
        # last_mlp3 (16->4) and last_mlp4 (4->1): degenerate contractions kept
        # off the MXU — VPU multiplies + XLU lane reductions.
        out = zero_col
        for j in range(n_h3):
            h3j = jnp.sum(h2 * w3_rows[j], axis=1, keepdims=True) + b3_j[j]
            out = out + w4_j[j] * jnp.maximum(h3j, 0.0)
        te_ref[a * B:(a + 1) * B, :] = out + b4
        node_rep_ref[a * B:(a + 1) * B, :] = node        # node.repeat(B, 1), written in-kernel
    # TODO(synk): predict_te is stored as a (B*B, 1) column (single masked store of
    # 16 scalars); a lane-dense (1, B*B) layout only pays off at much larger B and
    # would need a sublane->lane relayout of the result here.


# ---------------------------------------------------------------------------
# Parameter init (deterministic, PyTorch-style uniform(-1/sqrt(fan_in), ..))
# ---------------------------------------------------------------------------
def init_params(key):
    def lin(k, fan_in, fan_out):
        k1, k2 = jax.random.split(k)
        bound = 1.0 / math.sqrt(fan_in)
        W = jax.random.uniform(k1, (fan_out, fan_in), jnp.float32, -bound, bound)
        b = jax.random.uniform(k2, (fan_out,), jnp.float32, -bound, bound)
        return W, b

    ks = jax.random.split(key, 10)
    p = {}
    p["speed_W"], p["speed_b"] = lin(ks[0], 2, H)        # speed_embedding
    p["spatial_W"], p["spatial_b"] = lin(ks[1], 2, H)    # spatial_embedding
    bound = 1.0 / math.sqrt(H)
    p["w_ih"] = jax.random.uniform(ks[2], (4 * H, H), jnp.float32, -bound, bound)
    p["w_hh"] = jax.random.uniform(ks[3], (4 * H, H), jnp.float32, -bound, bound)
    p["b_ih"] = jax.random.uniform(ks[4], (4 * H,), jnp.float32, -bound, bound)
    p["b_hh"] = jax.random.uniform(ks[5], (4 * H,), jnp.float32, -bound, bound)
    p["W1"], p["b1"] = lin(ks[6], 128, 64)               # last_mlp1
    p["W2"], p["b2"] = lin(ks[7], 64, 16)                # last_mlp2
    p["W3"], p["b3"] = lin(ks[8], 16, 4)                 # last_mlp3
    p["W4"], p["b4"] = lin(ks[9], 4, 1)                  # last_mlp4
    return p


# ---------------------------------------------------------------------------
# One-time parameter preparation (hoisted OUT of the jitted per-step forward):
# transposes, W1 split, b_ih+b_hh, bias folds, bf16 casts for MXU operands.
# ---------------------------------------------------------------------------
def prepare_params(p):
    bf16 = jnp.bfloat16
    w1t = p["W1"].T                      # (128, 64)
    w1a = w1t[:H]                        # multiplies the spatial-embedding half
    w1b = w1t[H:]                        # multiplies the node half
    c1 = p["spatial_b"].reshape(1, H) @ w1a + p["b1"].reshape(1, H)   # folded bias (f32)
    return (
        p["speed_W"].T,                               # (2, H)   VPU rows, f32
        p["speed_b"].reshape(1, H),                   # (1, H)
        p["w_ih"].T.astype(bf16),                     # (H, 4H)  MXU operand
        p["w_hh"].T.astype(bf16),                     # (H, 4H)
        (p["b_ih"] + p["b_hh"]).reshape(1, 4 * H),    # (1, 4H)  f32
        p["spatial_W"].T,                             # (2, H)   VPU rows, f32
        w1a.astype(bf16),                             # (H, H)
        w1b.astype(bf16),                             # (H, H)
        c1,                                           # (1, H)   f32
        p["W2"].T.astype(bf16),                       # (H, 16)
        p["b2"].reshape(1, 16),
        p["W3"],                                      # (4, 16)  VPU tail, f32
        p["b3"].reshape(1, 4),
        p["W4"].reshape(1, 4),
        p["b4"].reshape(1, 1),
    )


# ---------------------------------------------------------------------------
# Forward wrapper (matches compute_TE.forward semantics)
# ---------------------------------------------------------------------------
@jax.jit
def _forward(xy, speed, prepped):
    B, T, _ = xy.shape
    # speed.view(-1, 2) -> Linear -> .view(-1, B, H): same row-major reshuffle;
    # the kernel consumes the flat (B*T, 2) rows in blocks of B per LSTM step.
    x2d = speed.reshape(B * T, 2)                 # free metadata reshape
    # last_pos = xy[..., -1] takes the last coordinate over all timesteps (B, T);
    # faithful to the reference, shape-consistent only because T == 2.
    last_pos = xy[..., -1]
    n = B * B
    return pl.pallas_call(
        _fused_kernel,
        out_shape=(jax.ShapeDtypeStruct((n, 1), jnp.float32),
                   jax.ShapeDtypeStruct((n, H), jnp.float32)),
        in_specs=[_vmem_spec() for _ in range(2 + len(prepped))],
        out_specs=(_vmem_spec(), _vmem_spec()),
    )(x2d, last_pos, *prepped)


def compute_te_forward(xy, speed, prepped):
    # load_map is deliberately NOT an argument: the reference feeds it through
    # embedding_map_net but never uses the result, so the dead 1 MiB input is
    # kept out of the jitted signature entirely.
    # TODO(synk): embedding_map_net (resnet ResidualBlocks + conv + adaptive
    # avg-pool) on load_map is not lowered; its output is discarded by the
    # reference forward and resnet.ResidualBlock source is unavailable.
    assert xy.shape[1] == 2 and speed.shape[1] == 2  # reference requires time_length == 2
    return _forward(xy, speed, prepped)


if __name__ == "__main__":
    key = jax.random.PRNGKey(0)
    k_xy, k_sp, k_p = jax.random.split(key, 3)

    B, T = 4, 2  # T must be 2 for the reference forward to be shape-consistent
    xy = jax.random.normal(k_xy, (B, T, 2), jnp.float32)
    speed = jax.random.normal(k_sp, (B, T, 2), jnp.float32)
    params = init_params(k_p)
    prepped = prepare_params(params)     # one-time prep, outside the per-step jit

    predict_te, node = compute_te_forward(xy, speed, prepped)
    jax.block_until_ready((predict_te, node))

    assert predict_te.shape == (B * B, 1) and predict_te.dtype == jnp.float32
    assert node.shape == (B * B, H) and node.dtype == jnp.float32
    assert bool(jnp.all(jnp.isfinite(predict_te))) and bool(jnp.all(jnp.isfinite(node)))
    print("KERNEL_OK")
</pallas_src>

<mosaic_0001>
module attributes {stable_mosaic.version = 11 : i64} {
  func.func @_fused_kernel(%arg0: memref<8x2xf32, #tpu.memory_space<vmem>>, %arg1: memref<4x2xf32, #tpu.memory_space<vmem>>, %arg2: memref<2x64xf32, #tpu.memory_space<vmem>>, %arg3: memref<1x64xf32, #tpu.memory_space<vmem>>, %arg4: memref<64x256xbf16, #tpu.memory_space<vmem>>, %arg5: memref<64x256xbf16, #tpu.memory_space<vmem>>, %arg6: memref<1x256xf32, #tpu.memory_space<vmem>>, %arg7: memref<2x64xf32, #tpu.memory_space<vmem>>, %arg8: memref<64x64xbf16, #tpu.memory_space<vmem>>, %arg9: memref<64x64xbf16, #tpu.memory_space<vmem>>, %arg10: memref<1x64xf32, #tpu.memory_space<vmem>>, %arg11: memref<64x16xbf16, #tpu.memory_space<vmem>>, %arg12: memref<1x16xf32, #tpu.memory_space<vmem>>, %arg13: memref<4x16xf32, #tpu.memory_space<vmem>>, %arg14: memref<1x4xf32, #tpu.memory_space<vmem>>, %arg15: memref<1x4xf32, #tpu.memory_space<vmem>>, %arg16: memref<1x1xf32, #tpu.memory_space<vmem>>, %arg17: memref<16x1xf32, #tpu.memory_space<vmem>>, %arg18: memref<16x64xf32, #tpu.memory_space<vmem>>) attributes {dimension_semantics = [], scalar_prefetch = 0 : i64, scratch_operands = 0 : i64, tpu.core_type = #tpu.core_type<tc>} {
    %c0 = arith.constant 0 : index
    %c0_0 = arith.constant 0 : index
    %0 = vector.load %arg2[%c0, %c0_0] : memref<2x64xf32, #tpu.memory_space<vmem>>, vector<1x64xf32>
    %c1 = arith.constant 1 : index
    %c0_1 = arith.constant 0 : index
    %1 = vector.load %arg2[%c1, %c0_1] : memref<2x64xf32, #tpu.memory_space<vmem>>, vector<1x64xf32>
    %c0_2 = arith.constant 0 : index
    %c0_3 = arith.constant 0 : index
    %2 = vector.load %arg3[%c0_2, %c0_3] : memref<1x64xf32, #tpu.memory_space<vmem>>, vector<1x64xf32>
    %c0_4 = arith.constant 0 : index
    %c0_5 = arith.constant 0 : index
    %3 = vector.load %arg4[%c0_4, %c0_5] : memref<64x256xbf16, #tpu.memory_space<vmem>>, vector<64x256xbf16>
    %c0_6 = arith.constant 0 : index
    %c0_7 = arith.constant 0 : index
    %4 = vector.load %arg5[%c0_6, %c0_7] : memref<64x256xbf16, #tpu.memory_space<vmem>>, vector<64x256xbf16>
    %c0_8 = arith.constant 0 : index
    %c0_9 = arith.constant 0 : index
    %5 = vector.load %arg6[%c0_8, %c0_9] : memref<1x256xf32, #tpu.memory_space<vmem>>, vector<1x256xf32>
    %c0_10 = arith.constant 0 : index
    %c0_11 = arith.constant 0 : index
    %6 = vector.load %arg0[%c0_10, %c0_11] : memref<8x2xf32, #tpu.memory_space<vmem>>, vector<4x2xf32>
    %7 = vector.extract_strided_slice %6 {offsets = [0, 0], sizes = [4, 1], strides = [1, 1]} : vector<4x2xf32> to vector<4x1xf32>
    %8 = vector.broadcast %7 : vector<4x1xf32> to vector<4x64xf32>
    %9 = vector.broadcast %0 : vector<1x64xf32> to vector<4x64xf32>
    %10 = arith.mulf %8, %9 : vector<4x64xf32>
    %11 = vector.extract_strided_slice %6 {offsets = [0, 1], sizes = [4, 1], strides = [1, 1]} : vector<4x2xf32> to vector<4x1xf32>
    %12 = vector.broadcast %11 : vector<4x1xf32> to vector<4x64xf32>
    %13 = vector.broadcast %1 : vector<1x64xf32> to vector<4x64xf32>
    %14 = arith.mulf %12, %13 : vector<4x64xf32>
    %15 = arith.addf %10, %14 : vector<4x64xf32>
    %16 = vector.broadcast %2 : vector<1x64xf32> to vector<4x64xf32>
    %17 = arith.addf %15, %16 : vector<4x64xf32>
    %18 = arith.truncf %17 : vector<4x64xf32> to vector<4x64xbf16>
    %cst = arith.constant dense<0.000000e+00> : vector<4x256xf32>
    %19 = tpu.matmul %18, %3, %cst {dimension_numbers = #tpu.dot_dimension_numbers<[1], [0], [0], [1], [0, 0, 1, 1], [], []>} : vector<4x64xbf16>, vector<64x256xbf16>, vector<4x256xf32> -> vector<4x256xf32>
    %20 = vector.broadcast %5 : vector<1x256xf32> to vector<4x256xf32>
    %21 = arith.addf %19, %20 : vector<4x256xf32>
    %22 = vector.extract_strided_slice %21 {offsets = [0, 128], sizes = [4, 64], strides = [1, 1]} : vector<4x256xf32> to vector<4x64xf32>
    %23 = math.tanh %22 : vector<4x64xf32>
    %24 = vector.extract_strided_slice %21 {offsets = [0, 192], sizes = [4, 64], strides = [1, 1]} : vector<4x256xf32> to vector<4x64xf32>
    %25 = arith.negf %24 : vector<4x64xf32>
    %26 = math.exp %25 : vector<4x64xf32>
    %cst_12 = arith.constant 1.000000e+00 : f32
    %27 = vector.broadcast %cst_12 : f32 to vector<4x64xf32>
    %28 = arith.addf %27, %26 : vector<4x64xf32>
    %29 = arith.divf %27, %28 : vector<4x64xf32>
    %30 = vector.extract_strided_slice %21 {offsets = [0, 0], sizes = [4, 64], strides = [1, 1]} : vector<4x256xf32> to vector<4x64xf32>
    %31 = arith.negf %30 : vector<4x64xf32>
    %32 = math.exp %31 : vector<4x64xf32>
    %cst_13 = arith.constant 1.000000e+00 : f32
    %33 = vector.broadcast %cst_13 : f32 to vector<4x64xf32>
    %34 = arith.addf %33, %32 : vector<4x64xf32>
    %35 = arith.divf %33, %34 : vector<4x64xf32>
    %36 = arith.mulf %35, %23 : vector<4x64xf32>
    %37 = math.tanh %36 : vector<4x64xf32>
    %38 = arith.mulf %29, %37 : vector<4x64xf32>
    %c4 = arith.constant 4 : index
    %c0_14 = arith.constant 0 : index
    %39 = vector.load %arg0[%c4, %c0_14] : memref<8x2xf32, #tpu.memory_space<vmem>>, vector<4x2xf32>
    %40 = vector.extract_strided_slice %39 {offsets = [0, 0], sizes = [4, 1], strides = [1, 1]} : vector<4x2xf32> to vector<4x1xf32>
    %41 = vector.broadcast %40 : vector<4x1xf32> to vector<4x64xf32>
    %42 = vector.broadcast %0 : vector<1x64xf32> to vector<4x64xf32>
    %43 = arith.mulf %41, %42 : vector<4x64xf32>
    %44 = vector.extract_strided_slice %39 {offsets = [0, 1], sizes = [4, 1], strides = [1, 1]} : vector<4x2xf32> to vector<4x1xf32>
    %45 = vector.broadcast %44 : vector<4x1xf32> to vector<4x64xf32>
    %46 = vector.broadcast %1 : vector<1x64xf32> to vector<4x64xf32>
    %47 = arith.mulf %45, %46 : vector<4x64xf32>
    %48 = arith.addf %43, %47 : vector<4x64xf32>
    %49 = vector.broadcast %2 : vector<1x64xf32> to vector<4x64xf32>
    %50 = arith.addf %48, %49 : vector<4x64xf32>
    %51 = arith.truncf %50 : vector<4x64xf32> to vector<4x64xbf16>
    %cst_15 = arith.constant dense<0.000000e+00> : vector<4x256xf32>
    %52 = tpu.matmul %51, %3, %cst_15 {dimension_numbers = #tpu.dot_dimension_numbers<[1], [0], [0], [1], [0, 0, 1, 1], [], []>} : vector<4x64xbf16>, vector<64x256xbf16>, vector<4x256xf32> -> vector<4x256xf32>
    %53 = vector.broadcast %5 : vector<1x256xf32> to vector<4x256xf32>
    %54 = arith.addf %52, %53 : vector<4x256xf32>
    %55 = arith.truncf %38 : vector<4x64xf32> to vector<4x64xbf16>
    %cst_16 = arith.constant dense<0.000000e+00> : vector<4x256xf32>
    %56 = tpu.matmul %55, %4, %cst_16 {dimension_numbers = #tpu.dot_dimension_numbers<[1], [0], [0], [1], [0, 0, 1, 1], [], []>} : vector<4x64xbf16>, vector<64x256xbf16>, vector<4x256xf32> -> vector<4x256xf32>
    %57 = arith.addf %54, %56 : vector<4x256xf32>
    %58 = vector.extract_strided_slice %57 {offsets = [0, 128], sizes = [4, 64], strides = [1, 1]} : vector<4x256xf32> to vector<4x64xf32>
    %59 = math.tanh %58 : vector<4x64xf32>
    %60 = vector.extract_strided_slice %57 {offsets = [0, 192], sizes = [4, 64], strides = [1, 1]} : vector<4x256xf32> to vector<4x64xf32>
    %61 = arith.negf %60 : vector<4x64xf32>
    %62 = math.exp %61 : vector<4x64xf32>
    %cst_17 = arith.constant 1.000000e+00 : f32
    %63 = vector.broadcast %cst_17 : f32 to vector<4x64xf32>
    %64 = arith.addf %63, %62 : vector<4x64xf32>
    %65 = arith.divf %63, %64 : vector<4x64xf32>
    %66 = vector.extract_strided_slice %57 {offsets = [0, 0], sizes = [4, 128], strides = [1, 1]} : vector<4x256xf32> to vector<4x128xf32>
    %67 = arith.negf %66 : vector<4x128xf32>
    %68 = math.exp %67 : vector<4x128xf32>
    %cst_18 = arith.constant 1.000000e+00 : f32
    %69 = vector.broadcast %cst_18 : f32 to vector<4x128xf32>
    %70 = arith.addf %69, %68 : vector<4x128xf32>
    %71 = arith.divf %69, %70 : vector<4x128xf32>
    %72 = vector.extract_strided_slice %71 {offsets = [0, 0], sizes = [4, 64], strides = [1, 1]} : vector<4x128xf32> to vector<4x64xf32>
    %73 = vector.extract_strided_slice %71 {offsets = [0, 64], sizes = [4, 64], strides = [1, 1]} : vector<4x128xf32> to vector<4x64xf32>
    %74 = arith.mulf %73, %36 : vector<4x64xf32>
    %75 = arith.mulf %72, %59 : vector<4x64xf32>
    %76 = arith.addf %74, %75 : vector<4x64xf32>
    %77 = math.tanh %76 : vector<4x64xf32>
    %78 = arith.mulf %65, %77 : vector<4x64xf32>
    %c0_19 = arith.constant 0 : index
    %c0_20 = arith.constant 0 : index
    %79 = vector.load %arg1[%c0_19, %c0_20] : memref<4x2xf32, #tpu.memory_space<vmem>>, vector<4x2xf32>
    %80 = vector.extract_strided_slice %79 {offsets = [0, 0], sizes = [4, 1], strides = [1, 1]} : vector<4x2xf32> to vector<4x1xf32>
    %c0_21 = arith.constant 0 : index
    %c0_22 = arith.constant 0 : index
    %81 = vector.load %arg7[%c0_21, %c0_22] : memref<2x64xf32, #tpu.memory_space<vmem>>, vector<1x64xf32>
    %82 = vector.broadcast %80 : vector<4x1xf32> to vector<4x64xf32>
    %83 = vector.broadcast %81 : vector<1x64xf32> to vector<4x64xf32>
    %84 = arith.mulf %82, %83 : vector<4x64xf32>
    %85 = vector.extract_strided_slice %79 {offsets = [0, 1], sizes = [4, 1], strides = [1, 1]} : vector<4x2xf32> to vector<4x1xf32>
    %c1_23 = arith.constant 1 : index
    %c0_24 = arith.constant 0 : index
    %86 = vector.load %arg7[%c1_23, %c0_24] : memref<2x64xf32, #tpu.memory_space<vmem>>, vector<1x64xf32>
    %87 = vector.broadcast %85 : vector<4x1xf32> to vector<4x64xf32>
    %88 = vector.broadcast %86 : vector<1x64xf32> to vector<4x64xf32>
    %89 = arith.mulf %87, %88 : vector<4x64xf32>
    %90 = arith.addf %84, %89 : vector<4x64xf32>
    %91 = arith.truncf %90 : vector<4x64xf32> to vector<4x64xbf16>
    %c0_25 = arith.constant 0 : index
    %c0_26 = arith.constant 0 : index
    %92 = vector.load %arg8[%c0_25, %c0_26] : memref<64x64xbf16, #tpu.memory_space<vmem>>, vector<64x64xbf16>
    %cst_27 = arith.constant dense<0.000000e+00> : vector<4x64xf32>
    %93 = tpu.matmul %91, %92, %cst_27 {dimension_numbers = #tpu.dot_dimension_numbers<[1], [0], [0], [1], [0, 0, 1, 1], [], []>} : vector<4x64xbf16>, vector<64x64xbf16>, vector<4x64xf32> -> vector<4x64xf32>
    %94 = arith.truncf %78 : vector<4x64xf32> to vector<4x64xbf16>
    %c0_28 = arith.constant 0 : index
    %c0_29 = arith.constant 0 : index
    %95 = vector.load %arg9[%c0_28, %c0_29] : memref<64x64xbf16, #tpu.memory_space<vmem>>, vector<64x64xbf16>
    %cst_30 = arith.constant dense<0.000000e+00> : vector<4x64xf32>
    %96 = tpu.matmul %94, %95, %cst_30 {dimension_numbers = #tpu.dot_dimension_numbers<[1], [0], [0], [1], [0, 0, 1, 1], [], []>} : vector<4x64xbf16>, vector<64x64xbf16>, vector<4x64xf32> -> vector<4x64xf32>
    %97 = arith.addf %93, %96 : vector<4x64xf32>
    %c0_31 = arith.constant 0 : index
    %c0_32 = arith.constant 0 : index
    %98 = vector.load %arg10[%c0_31, %c0_32] : memref<1x64xf32, #tpu.memory_space<vmem>>, vector<1x64xf32>
    %99 = vector.broadcast %98 : vector<1x64xf32> to vector<4x64xf32>
    %100 = arith.addf %97, %99 : vector<4x64xf32>
    %c0_33 = arith.constant 0 : index
    %c0_34 = arith.constant 0 : index
    %101 = vector.load %arg11[%c0_33, %c0_34] : memref<64x16xbf16, #tpu.memory_space<vmem>>, vector<64x16xbf16>
    %c0_35 = arith.constant 0 : index
    %c0_36 = arith.constant 0 : index
    %102 = vector.load %arg12[%c0_35, %c0_36] : memref<1x16xf32, #tpu.memory_space<vmem>>, vector<1x16xf32>
    %c0_37 = arith.constant 0 : index
    %c0_38 = arith.constant 0 : index
    %103 = vector.load %arg16[%c0_37, %c0_38] : memref<1x1xf32, #tpu.memory_space<vmem>>, vector<1x1xf32>
    %c0_39 = arith.constant 0 : index
    %c0_40 = arith.constant 0 : index
    %104 = vector.load %arg13[%c0_39, %c0_40] : memref<4x16xf32, #tpu.memory_space<vmem>>, vector<1x16xf32>
    %c1_41 = arith.constant 1 : index
    %c0_42 = arith.constant 0 : index
    %105 = vector.load %arg13[%c1_41, %c0_42] : memref<4x16xf32, #tpu.memory_space<vmem>>, vector<1x16xf32>
    %c2 = arith.constant 2 : index
    %c0_43 = arith.constant 0 : index
    %106 = vector.load %arg13[%c2, %c0_43] : memref<4x16xf32, #tpu.memory_space<vmem>>, vector<1x16xf32>
    %c3 = arith.constant 3 : index
    %c0_44 = arith.constant 0 : index
    %107 = vector.load %arg13[%c3, %c0_44] : memref<4x16xf32, #tpu.memory_space<vmem>>, vector<1x16xf32>
    %c0_45 = arith.constant 0 : index
    %c0_46 = arith.constant 0 : index
    %108 = vector.load %arg14[%c0_45, %c0_46] : memref<1x4xf32, #tpu.memory_space<vmem>>, vector<1x1xf32>
    %c0_47 = arith.constant 0 : index
    %c1_48 = arith.constant 1 : index
    %109 = vector.load %arg14[%c0_47, %c1_48] : memref<1x4xf32, #tpu.memory_space<vmem>>, vector<1x1xf32>
    %c0_49 = arith.constant 0 : index
    %c2_50 = arith.constant 2 : index
    %110 = vector.load %arg14[%c0_49, %c2_50] : memref<1x4xf32, #tpu.memory_space<vmem>>, vector<1x1xf32>
    %c0_51 = arith.constant 0 : index
    %c3_52 = arith.constant 3 : index
    %111 = vector.load %arg14[%c0_51, %c3_52] : memref<1x4xf32, #tpu.memory_space<vmem>>, vector<1x1xf32>
    %c0_53 = arith.constant 0 : index
    %c0_54 = arith.constant 0 : index
    %112 = vector.load %arg15[%c0_53, %c0_54] : memref<1x4xf32, #tpu.memory_space<vmem>>, vector<1x1xf32>
    %c0_55 = arith.constant 0 : index
    %c1_56 = arith.constant 1 : index
    %113 = vector.load %arg15[%c0_55, %c1_56] : memref<1x4xf32, #tpu.memory_space<vmem>>, vector<1x1xf32>
    %c0_57 = arith.constant 0 : index
    %c2_58 = arith.constant 2 : index
    %114 = vector.load %arg15[%c0_57, %c2_58] : memref<1x4xf32, #tpu.memory_space<vmem>>, vector<1x1xf32>
    %c0_59 = arith.constant 0 : index
    %c3_60 = arith.constant 3 : index
    %115 = vector.load %arg15[%c0_59, %c3_60] : memref<1x4xf32, #tpu.memory_space<vmem>>, vector<1x1xf32>
    %cst_61 = arith.constant 0.000000e+00 : f32
    %116 = vector.broadcast %cst_61 : f32 to vector<4x1xf32>
    %117 = vector.extract_strided_slice %93 {offsets = [0, 0], sizes = [1, 64], strides = [1, 1]} : vector<4x64xf32> to vector<1x64xf32>
    %118 = vector.broadcast %117 : vector<1x64xf32> to vector<4x64xf32>
    %119 = arith.subf %100, %118 : vector<4x64xf32>
    %cst_62 = arith.constant 0.000000e+00 : f32
    %120 = vector.broadcast %cst_62 : f32 to vector<4x64xf32>
    %121 = arith.maximumf %119, %120 : vector<4x64xf32>
    %122 = arith.truncf %121 : vector<4x64xf32> to vector<4x64xbf16>
    %cst_63 = arith.constant dense<0.000000e+00> : vector<4x16xf32>
    %123 = tpu.matmul %122, %101, %cst_63 {dimension_numbers = #tpu.dot_dimension_numbers<[1], [0], [0], [1], [0, 0, 1, 1], [], []>} : vector<4x64xbf16>, vector<64x16xbf16>, vector<4x16xf32> -> vector<4x16xf32>
    %124 = vector.broadcast %102 : vector<1x16xf32> to vector<4x16xf32>
    %125 = arith.addf %123, %124 : vector<4x16xf32>
    %cst_64 = arith.constant 0.000000e+00 : f32
    %126 = vector.broadcast %cst_64 : f32 to vector<4x16xf32>
    %127 = arith.maximumf %125, %126 : vector<4x16xf32>
    %128 = vector.broadcast %104 : vector<1x16xf32> to vector<4x16xf32>
    %129 = arith.mulf %127, %128 : vector<4x16xf32>
    %cst_65 = arith.constant dense<0.000000e+00> : vector<4xf32>
    %130 = vector.multi_reduction <add>, %129, %cst_65 [1] : vector<4x16xf32> to vector<4xf32>
    %131 = vector.shape_cast %130 : vector<4xf32> to vector<4x1xf32>
    %132 = vector.broadcast %108 : vector<1x1xf32> to vector<4x1xf32>
    %133 = arith.addf %131, %132 : vector<4x1xf32>
    %cst_66 = arith.constant 0.000000e+00 : f32
    %134 = vector.broadcast %cst_66 : f32 to vector<4x1xf32>
    %135 = arith.maximumf %133, %134 : vector<4x1xf32>
    %136 = vector.broadcast %112 : vector<1x1xf32> to vector<4x1xf32>
    %137 = arith.mulf %136, %135 : vector<4x1xf32>
    %138 = arith.addf %116, %137 : vector<4x1xf32>
    %139 = vector.broadcast %105 : vector<1x16xf32> to vector<4x16xf32>
    %140 = arith.mulf %127, %139 : vector<4x16xf32>
    %cst_67 = arith.constant dense<0.000000e+00> : vector<4xf32>
    %141 = vector.multi_reduction <add>, %140, %cst_67 [1] : vector<4x16xf32> to vector<4xf32>
    %142 = vector.shape_cast %141 : vector<4xf32> to vector<4x1xf32>
    %143 = vector.broadcast %109 : vector<1x1xf32> to vector<4x1xf32>
    %144 = arith.addf %142, %143 : vector<4x1xf32>
    %cst_68 = arith.constant 0.000000e+00 : f32
    %145 = vector.broadcast %cst_68 : f32 to vector<4x1xf32>
    %146 = arith.maximumf %144, %145 : vector<4x1xf32>
    %147 = vector.broadcast %113 : vector<1x1xf32> to vector<4x1xf32>
    %148 = arith.mulf %147, %146 : vector<4x1xf32>
    %149 = arith.addf %138, %148 : vector<4x1xf32>
    %150 = vector.broadcast %106 : vector<1x16xf32> to vector<4x16xf32>
    %151 = arith.mulf %127, %150 : vector<4x16xf32>
    %cst_69 = arith.constant dense<0.000000e+00> : vector<4xf32>
    %152 = vector.multi_reduction <add>, %151, %cst_69 [1] : vector<4x16xf32> to vector<4xf32>
    %153 = vector.shape_cast %152 : vector<4xf32> to vector<4x1xf32>
    %154 = vector.broadcast %110 : vector<1x1xf32> to vector<4x1xf32>
    %155 = arith.addf %153, %154 : vector<4x1xf32>
    %cst_70 = arith.constant 0.000000e+00 : f32
    %156 = vector.broadcast %cst_70 : f32 to vector<4x1xf32>
    %157 = arith.maximumf %155, %156 : vector<4x1xf32>
    %158 = vector.broadcast %114 : vector<1x1xf32> to vector<4x1xf32>
    %159 = arith.mulf %158, %157 : vector<4x1xf32>
    %160 = arith.addf %149, %159 : vector<4x1xf32>
    %161 = vector.broadcast %107 : vector<1x16xf32> to vector<4x16xf32>
    %162 = arith.mulf %127, %161 : vector<4x16xf32>
    %cst_71 = arith.constant dense<0.000000e+00> : vector<4xf32>
    %163 = vector.multi_reduction <add>, %162, %cst_71 [1] : vector<4x16xf32> to vector<4xf32>
    %164 = vector.shape_cast %163 : vector<4xf32> to vector<4x1xf32>
    %165 = vector.broadcast %111 : vector<1x1xf32> to vector<4x1xf32>
    %166 = arith.addf %164, %165 : vector<4x1xf32>
    %cst_72 = arith.constant 0.000000e+00 : f32
    %167 = vector.broadcast %cst_72 : f32 to vector<4x1xf32>
    %168 = arith.maximumf %166, %167 : vector<4x1xf32>
    %169 = vector.broadcast %115 : vector<1x1xf32> to vector<4x1xf32>
    %170 = arith.mulf %169, %168 : vector<4x1xf32>
    %171 = arith.addf %160, %170 : vector<4x1xf32>
    %172 = vector.broadcast %103 : vector<1x1xf32> to vector<4x1xf32>
    %173 = arith.addf %171, %172 : vector<4x1xf32>
    %c0_73 = arith.constant 0 : index
    %c0_74 = arith.constant 0 : index
    %174 = vector.load %arg17[%c0_73, %c0_74] : memref<16x1xf32, #tpu.memory_space<vmem>>, vector<4x1xf32>
    tpu.vector_store %arg17[%c0_73, %c0_74], %173 {strides = array<i32>} : memref<16x1xf32, #tpu.memory_space<vmem>>, vector<4x1xf32>,
    %c0_75 = arith.constant 0 : index
    %c0_76 = arith.constant 0 : index
    %175 = vector.load %arg18[%c0_75, %c0_76] : memref<16x64xf32, #tpu.memory_space<vmem>>, vector<4x64xf32>
    tpu.vector_store %arg18[%c0_75, %c0_76], %78 {strides = array<i32>} : memref<16x64xf32, #tpu.memory_space<vmem>>, vector<4x64xf32>,
    %176 = vector.extract_strided_slice %93 {offsets = [1, 0], sizes = [1, 64], strides = [1, 1]} : vector<4x64xf32> to vector<1x64xf32>
    %177 = vector.broadcast %176 : vector<1x64xf32> to vector<4x64xf32>
    %178 = arith.subf %100, %177 : vector<4x64xf32>
    %cst_77 = arith.constant 0.000000e+00 : f32
    %179 = vector.broadcast %cst_77 : f32 to vector<4x64xf32>
    %180 = arith.maximumf %178, %179 : vector<4x64xf32>
    %181 = arith.truncf %180 : vector<4x64xf32> to vector<4x64xbf16>
    %cst_78 = arith.constant dense<0.000000e+00> : vector<4x16xf32>
    %182 = tpu.matmul %181, %101, %cst_78 {dimension_numbers = #tpu.dot_dimension_numbers<[1], [0], [0], [1], [0, 0, 1, 1], [], []>} : vector<4x64xbf16>, vector<64x16xbf16>, vector<4x16xf32> -> vector<4x16xf32>
    %183 = vector.broadcast %102 : vector<1x16xf32> to vector<4x16xf32>
    %184 = arith.addf %182, %183 : vector<4x16xf32>
    %cst_79 = arith.constant 0.000000e+00 : f32
    %185 = vector.broadcast %cst_79 : f32 to vector<4x16xf32>
    %186 = arith.maximumf %184, %185 : vector<4x16xf32>
    %187 = vector.broadcast %104 : vector<1x16xf32> to vector<4x16xf32>
    %188 = arith.mulf %186, %187 : vector<4x16xf32>
    %cst_80 = arith.constant dense<0.000000e+00> : vector<4xf32>
    %189 = vector.multi_reduction <add>, %188, %cst_80 [1] : vector<4x16xf32> to vector<4xf32>
    %190 = vector.shape_cast %189 : vector<4xf32> to vector<4x1xf32>
    %191 = vector.broadcast %108 : vector<1x1xf32> to vector<4x1xf32>
    %192 = arith.addf %190, %191 : vector<4x1xf32>
    %cst_81 = arith.constant 0.000000e+00 : f32
    %193 = vector.broadcast %cst_81 : f32 to vector<4x1xf32>
    %194 = arith.maximumf %192, %193 : vector<4x1xf32>
    %195 = vector.broadcast %112 : vector<1x1xf32> to vector<4x1xf32>
    %196 = arith.mulf %195, %194 : vector<4x1xf32>
    %197 = arith.addf %116, %196 : vector<4x1xf32>
    %198 = vector.broadcast %105 : vector<1x16xf32> to vector<4x16xf32>
    %199 = arith.mulf %186, %198 : vector<4x16xf32>
    %cst_82 = arith.constant dense<0.000000e+00> : vector<4xf32>
    %200 = vector.multi_reduction <add>, %199, %cst_82 [1] : vector<4x16xf32> to vector<4xf32>
    %201 = vector.shape_cast %200 : vector<4xf32> to vector<4x1xf32>
    %202 = vector.broadcast %109 : vector<1x1xf32> to vector<4x1xf32>
    %203 = arith.addf %201, %202 : vector<4x1xf32>
    %cst_83 = arith.constant 0.000000e+00 : f32
    %204 = vector.broadcast %cst_83 : f32 to vector<4x1xf32>
    %205 = arith.maximumf %203, %204 : vector<4x1xf32>
    %206 = vector.broadcast %113 : vector<1x1xf32> to vector<4x1xf32>
    %207 = arith.mulf %206, %205 : vector<4x1xf32>
    %208 = arith.addf %197, %207 : vector<4x1xf32>
    %209 = vector.broadcast %106 : vector<1x16xf32> to vector<4x16xf32>
    %210 = arith.mulf %186, %209 : vector<4x16xf32>
    %cst_84 = arith.constant dense<0.000000e+00> : vector<4xf32>
    %211 = vector.multi_reduction <add>, %210, %cst_84 [1] : vector<4x16xf32> to vector<4xf32>
    %212 = vector.shape_cast %211 : vector<4xf32> to vector<4x1xf32>
    %213 = vector.broadcast %110 : vector<1x1xf32> to vector<4x1xf32>
    %214 = arith.addf %212, %213 : vector<4x1xf32>
    %cst_85 = arith.constant 0.000000e+00 : f32
    %215 = vector.broadcast %cst_85 : f32 to vector<4x1xf32>
    %216 = arith.maximumf %214, %215 : vector<4x1xf32>
    %217 = vector.broadcast %114 : vector<1x1xf32> to vector<4x1xf32>
    %218 = arith.mulf %217, %216 : vector<4x1xf32>
    %219 = arith.addf %208, %218 : vector<4x1xf32>
    %220 = vector.broadcast %107 : vector<1x16xf32> to vector<4x16xf32>
    %221 = arith.mulf %186, %220 : vector<4x16xf32>
    %cst_86 = arith.constant dense<0.000000e+00> : vector<4xf32>
    %222 = vector.multi_reduction <add>, %221, %cst_86 [1] : vector<4x16xf32> to vector<4xf32>
    %223 = vector.shape_cast %222 : vector<4xf32> to vector<4x1xf32>
    %224 = vector.broadcast %111 : vector<1x1xf32> to vector<4x1xf32>
    %225 = arith.addf %223, %224 : vector<4x1xf32>
    %cst_87 = arith.constant 0.000000e+00 : f32
    %226 = vector.broadcast %cst_87 : f32 to vector<4x1xf32>
    %227 = arith.maximumf %225, %226 : vector<4x1xf32>
    %228 = vector.broadcast %115 : vector<1x1xf32> to vector<4x1xf32>
    %229 = arith.mulf %228, %227 : vector<4x1xf32>
    %230 = arith.addf %219, %229 : vector<4x1xf32>
    %231 = vector.broadcast %103 : vector<1x1xf32> to vector<4x1xf32>
    %232 = arith.addf %230, %231 : vector<4x1xf32>
    %c4_88 = arith.constant 4 : index
    %c0_89 = arith.constant 0 : index
    %233 = vector.load %arg17[%c4_88, %c0_89] : memref<16x1xf32, #tpu.memory_space<vmem>>, vector<4x1xf32>
    tpu.vector_store %arg17[%c4_88, %c0_89], %232 {strides = array<i32>} : memref<16x1xf32, #tpu.memory_space<vmem>>, vector<4x1xf32>,
    %c4_90 = arith.constant 4 : index
    %c0_91 = arith.constant 0 : index
    %234 = vector.load %arg18[%c4_90, %c0_91] : memref<16x64xf32, #tpu.memory_space<vmem>>, vector<4x64xf32>
    tpu.vector_store %arg18[%c4_90, %c0_91], %78 {strides = array<i32>} : memref<16x64xf32, #tpu.memory_space<vmem>>, vector<4x64xf32>,
    %235 = vector.extract_strided_slice %93 {offsets = [2, 0], sizes = [1, 64], strides = [1, 1]} : vector<4x64xf32> to vector<1x64xf32>
    %236 = vector.broadcast %235 : vector<1x64xf32> to vector<4x64xf32>
    %237 = arith.subf %100, %236 : vector<4x64xf32>
    %cst_92 = arith.constant 0.000000e+00 : f32
    %238 = vector.broadcast %cst_92 : f32 to vector<4x64xf32>
    %239 = arith.maximumf %237, %238 : vector<4x64xf32>
    %240 = arith.truncf %239 : vector<4x64xf32> to vector<4x64xbf16>
    %cst_93 = arith.constant dense<0.000000e+00> : vector<4x16xf32>
    %241 = tpu.matmul %240, %101, %cst_93 {dimension_numbers = #tpu.dot_dimension_numbers<[1], [0], [0], [1], [0, 0, 1, 1], [], []>} : vector<4x64xbf16>, vector<64x16xbf16>, vector<4x16xf32> -> vector<4x16xf32>
    %242 = vector.broadcast %102 : vector<1x16xf32> to vector<4x16xf32>
    %243 = arith.addf %241, %242 : vector<4x16xf32>
    %cst_94 = arith.constant 0.000000e+00 : f32
    %244 = vector.broadcast %cst_94 : f32 to vector<4x16xf32>
    %245 = arith.maximumf %243, %244 : vector<4x16xf32>
    %246 = vector.broadcast %104 : vector<1x16xf32> to vector<4x16xf32>
    %247 = arith.mulf %245, %246 : vector<4x16xf32>
    %cst_95 = arith.constant dense<0.000000e+00> : vector<4xf32>
    %248 = vector.multi_reduction <add>, %247, %cst_95 [1] : vector<4x16xf32> to vector<4xf32>
    %249 = vector.shape_cast %248 : vector<4xf32> to vector<4x1xf32>
    %250 = vector.broadcast %108 : vector<1x1xf32> to vector<4x1xf32>
    %251 = arith.addf %249, %250 : vector<4x1xf32>
    %cst_96 = arith.constant 0.000000e+00 : f32
    %252 = vector.broadcast %cst_96 : f32 to vector<4x1xf32>
    %253 = arith.maximumf %251, %252 : vector<4x1xf32>
    %254 = vector.broadcast %112 : vector<1x1xf32> to vector<4x1xf32>
    %255 = arith.mulf %254, %253 : vector<4x1xf32>
    %256 = arith.addf %116, %255 : vector<4x1xf32>
    %257 = vector.broadcast %105 : vector<1x16xf32> to vector<4x16xf32>
    %258 = arith.mulf %245, %257 : vector<4x16xf32>
    %cst_97 = arith.constant dense<0.000000e+00> : vector<4xf32>
    %259 = vector.multi_reduction <add>, %258, %cst_97 [1] : vector<4x16xf32> to vector<4xf32>
    %260 = vector.shape_cast %259 : vector<4xf32> to vector<4x1xf32>
    %261 = vector.broadcast %109 : vector<1x1xf32> to vector<4x1xf32>
    %262 = arith.addf %260, %261 : vector<4x1xf32>
    %cst_98 = arith.constant 0.000000e+00 : f32
    %263 = vector.broadcast %cst_98 : f32 to vector<4x1xf32>
    %264 = arith.maximumf %262, %263 : vector<4x1xf32>
    %265 = vector.broadcast %113 : vector<1x1xf32> to vector<4x1xf32>
    %266 = arith.mulf %265, %264 : vector<4x1xf32>
    %267 = arith.addf %256, %266 : vector<4x1xf32>
    %268 = vector.broadcast %106 : vector<1x16xf32> to vector<4x16xf32>
    %269 = arith.mulf %245, %268 : vector<4x16xf32>
    %cst_99 = arith.constant dense<0.000000e+00> : vector<4xf32>
    %270 = vector.multi_reduction <add>, %269, %cst_99 [1] : vector<4x16xf32> to vector<4xf32>
    %271 = vector.shape_cast %270 : vector<4xf32> to vector<4x1xf32>
    %272 = vector.broadcast %110 : vector<1x1xf32> to vector<4x1xf32>
    %273 = arith.addf %271, %272 : vector<4x1xf32>
    %cst_100 = arith.constant 0.000000e+00 : f32
    %274 = vector.broadcast %cst_100 : f32 to vector<4x1xf32>
    %275 = arith.maximumf %273, %274 : vector<4x1xf32>
    %276 = vector.broadcast %114 : vector<1x1xf32> to vector<4x1xf32>
    %277 = arith.mulf %276, %275 : vector<4x1xf32>
    %278 = arith.addf %267, %277 : vector<4x1xf32>
    %279 = vector.broadcast %107 : vector<1x16xf32> to vector<4x16xf32>
    %280 = arith.mulf %245, %279 : vector<4x16xf32>
    %cst_101 = arith.constant dense<0.000000e+00> : vector<4xf32>
    %281 = vector.multi_reduction <add>, %280, %cst_101 [1] : vector<4x16xf32> to vector<4xf32>
    %282 = vector.shape_cast %281 : vector<4xf32> to vector<4x1xf32>
    %283 = vector.broadcast %111 : vector<1x1xf32> to vector<4x1xf32>
    %284 = arith.addf %282, %283 : vector<4x1xf32>
    %cst_102 = arith.constant 0.000000e+00 : f32
    %285 = vector.broadcast %cst_102 : f32 to vector<4x1xf32>
    %286 = arith.maximumf %284, %285 : vector<4x1xf32>
    %287 = vector.broadcast %115 : vector<1x1xf32> to vector<4x1xf32>
    %288 = arith.mulf %287, %286 : vector<4x1xf32>
    %289 = arith.addf %278, %288 : vector<4x1xf32>
    %290 = vector.broadcast %103 : vector<1x1xf32> to vector<4x1xf32>
    %291 = arith.addf %289, %290 : vector<4x1xf32>
    %c8 = arith.constant 8 : index
    %c0_103 = arith.constant 0 : index
    %292 = vector.load %arg17[%c8, %c0_103] : memref<16x1xf32, #tpu.memory_space<vmem>>, vector<4x1xf32>
    tpu.vector_store %arg17[%c8, %c0_103], %291 {strides = array<i32>} : memref<16x1xf32, #tpu.memory_space<vmem>>, vector<4x1xf32>,
    %c8_104 = arith.constant 8 : index
    %c0_105 = arith.constant 0 : index
    %293 = vector.load %arg18[%c8_104, %c0_105] : memref<16x64xf32, #tpu.memory_space<vmem>>, vector<4x64xf32>
    tpu.vector_store %arg18[%c8_104, %c0_105], %78 {strides = array<i32>} : memref<16x64xf32, #tpu.memory_space<vmem>>, vector<4x64xf32>,
    %294 = vector.extract_strided_slice %93 {offsets = [3, 0], sizes = [1, 64], strides = [1, 1]} : vector<4x64xf32> to vector<1x64xf32>
    %295 = vector.broadcast %294 : vector<1x64xf32> to vector<4x64xf32>
    %296 = arith.subf %100, %295 : vector<4x64xf32>
    %cst_106 = arith.constant 0.000000e+00 : f32
    %297 = vector.broadcast %cst_106 : f32 to vector<4x64xf32>
    %298 = arith.maximumf %296, %297 : vector<4x64xf32>
    %299 = arith.truncf %298 : vector<4x64xf32> to vector<4x64xbf16>
    %cst_107 = arith.constant dense<0.000000e+00> : vector<4x16xf32>
    %300 = tpu.matmul %299, %101, %cst_107 {dimension_numbers = #tpu.dot_dimension_numbers<[1], [0], [0], [1], [0, 0, 1, 1], [], []>} : vector<4x64xbf16>, vector<64x16xbf16>, vector<4x16xf32> -> vector<4x16xf32>
    %301 = vector.broadcast %102 : vector<1x16xf32> to vector<4x16xf32>
    %302 = arith.addf %300, %301 : vector<4x16xf32>
    %cst_108 = arith.constant 0.000000e+00 : f32
    %303 = vector.broadcast %cst_108 : f32 to vector<4x16xf32>
    %304 = arith.maximumf %302, %303 : vector<4x16xf32>
    %305 = vector.broadcast %104 : vector<1x16xf32> to vector<4x16xf32>
    %306 = arith.mulf %304, %305 : vector<4x16xf32>
    %cst_109 = arith.constant dense<0.000000e+00> : vector<4xf32>
    %307 = vector.multi_reduction <add>, %306, %cst_109 [1] : vector<4x16xf32> to vector<4xf32>
    %308 = vector.shape_cast %307 : vector<4xf32> to vector<4x1xf32>
    %309 = vector.broadcast %108 : vector<1x1xf32> to vector<4x1xf32>
    %310 = arith.addf %308, %309 : vector<4x1xf32>
    %cst_110 = arith.constant 0.000000e+00 : f32
    %311 = vector.broadcast %cst_110 : f32 to vector<4x1xf32>
    %312 = arith.maximumf %310, %311 : vector<4x1xf32>
    %313 = vector.broadcast %112 : vector<1x1xf32> to vector<4x1xf32>
    %314 = arith.mulf %313, %312 : vector<4x1xf32>
    %315 = arith.addf %116, %314 : vector<4x1xf32>
    %316 = vector.broadcast %105 : vector<1x16xf32> to vector<4x16xf32>
    %317 = arith.mulf %304, %316 : vector<4x16xf32>
    %cst_111 = arith.constant dense<0.000000e+00> : vector<4xf32>
    %318 = vector.multi_reduction <add>, %317, %cst_111 [1] : vector<4x16xf32> to vector<4xf32>
    %319 = vector.shape_cast %318 : vector<4xf32> to vector<4x1xf32>
    %320 = vector.broadcast %109 : vector<1x1xf32> to vector<4x1xf32>
    %321 = arith.addf %319, %320 : vector<4x1xf32>
    %cst_112 = arith.constant 0.000000e+00 : f32
    %322 = vector.broadcast %cst_112 : f32 to vector<4x1xf32>
    %323 = arith.maximumf %321, %322 : vector<4x1xf32>
    %324 = vector.broadcast %113 : vector<1x1xf32> to vector<4x1xf32>
    %325 = arith.mulf %324, %323 : vector<4x1xf32>
    %326 = arith.addf %315, %325 : vector<4x1xf32>
    %327 = vector.broadcast %106 : vector<1x16xf32> to vector<4x16xf32>
    %328 = arith.mulf %304, %327 : vector<4x16xf32>
    %cst_113 = arith.constant dense<0.000000e+00> : vector<4xf32>
    %329 = vector.multi_reduction <add>, %328, %cst_113 [1] : vector<4x16xf32> to vector<4xf32>
    %330 = vector.shape_cast %329 : vector<4xf32> to vector<4x1xf32>
    %331 = vector.broadcast %110 : vector<1x1xf32> to vector<4x1xf32>
    %332 = arith.addf %330, %331 : vector<4x1xf32>
    %cst_114 = arith.constant 0.000000e+00 : f32
    %333 = vector.broadcast %cst_114 : f32 to vector<4x1xf32>
    %334 = arith.maximumf %332, %333 : vector<4x1xf32>
    %335 = vector.broadcast %114 : vector<1x1xf32> to vector<4x1xf32>
    %336 = arith.mulf %335, %334 : vector<4x1xf32>
    %337 = arith.addf %326, %336 : vector<4x1xf32>
    %338 = vector.broadcast %107 : vector<1x16xf32> to vector<4x16xf32>
    %339 = arith.mulf %304, %338 : vector<4x16xf32>
    %cst_115 = arith.constant dense<0.000000e+00> : vector<4xf32>
    %340 = vector.multi_reduction <add>, %339, %cst_115 [1] : vector<4x16xf32> to vector<4xf32>
    %341 = vector.shape_cast %340 : vector<4xf32> to vector<4x1xf32>
    %342 = vector.broadcast %111 : vector<1x1xf32> to vector<4x1xf32>
    %343 = arith.addf %341, %342 : vector<4x1xf32>
    %cst_116 = arith.constant 0.000000e+00 : f32
    %344 = vector.broadcast %cst_116 : f32 to vector<4x1xf32>
    %345 = arith.maximumf %343, %344 : vector<4x1xf32>
    %346 = vector.broadcast %115 : vector<1x1xf32> to vector<4x1xf32>
    %347 = arith.mulf %346, %345 : vector<4x1xf32>
    %348 = arith.addf %337, %347 : vector<4x1xf32>
    %349 = vector.broadcast %103 : vector<1x1xf32> to vector<4x1xf32>
    %350 = arith.addf %348, %349 : vector<4x1xf32>
    %c12 = arith.constant 12 : index
    %c0_117 = arith.constant 0 : index
    %351 = vector.load %arg17[%c12, %c0_117] : memref<16x1xf32, #tpu.memory_space<vmem>>, vector<4x1xf32>
    tpu.vector_store %arg17[%c12, %c0_117], %350 {strides = array<i32>} : memref<16x1xf32, #tpu.memory_space<vmem>>, vector<4x1xf32>,
    %c12_118 = arith.constant 12 : index
    %c0_119 = arith.constant 0 : index
    %352 = vector.load %arg18[%c12_118, %c0_119] : memref<16x64xf32, #tpu.memory_space<vmem>>, vector<4x64xf32>
    tpu.vector_store %arg18[%c12_118, %c0_119], %78 {strides = array<i32>} : memref<16x64xf32, #tpu.memory_space<vmem>>, vector<4x64xf32>,
    return
  }
}

</mosaic_0001>

<llo_original>
// kernel: _forward.1
$region0: #{_forward.1}
  #allocation0 [shape = 'u32[]', space=smem, size = 0x4, offset = 0x4, fixed_abs, tag = 'smem constant byte address 0x4 - core index']
  #allocation1 [shape = 'u32[72,128]{1,0:T(1,128)}', space=vmem, size = 0x9000, scoped, tag = 'internal scratch']
  #allocation2 [shape = 'f32[1,1]{1,0:T(1,128)S(1)}', space=vmem, size = 0x200, scoped, tag = 'scoped memory for _forward.1']
  %s0 = inlined_call_operand.vmem [shape: f32[8,2], index: 0, kind: input, shape index: {}]
  %s1 = inlined_call_operand.vmem [shape: f32[4,2], index: 1, kind: input, shape index: {}]
  %s2 = inlined_call_operand.vmem [shape: f32[2,64], index: 2, kind: input, shape index: {}]
  %s3 = inlined_call_operand.vmem [shape: f32[1,64], index: 3, kind: input, shape index: {}]
  %s4 = inlined_call_operand.hbm [shape: bf16[64,256], index: 4, kind: input, shape index: {}]
  %s5 = inlined_call_operand.hbm [shape: bf16[64,256], index: 5, kind: input, shape index: {}]
  %s6 = inlined_call_operand.vmem [shape: f32[1,256], index: 6, kind: input, shape index: {}]
  %s7 = inlined_call_operand.vmem [shape: f32[2,64], index: 7, kind: input, shape index: {}]
  %s8 = inlined_call_operand.vmem [shape: bf16[64,64], index: 8, kind: input, shape index: {}]
  %s9 = inlined_call_operand.hbm [shape: bf16[64,64], index: 9, kind: input, shape index: {}]
  %s10 = inlined_call_operand.vmem [shape: f32[1,64], index: 10, kind: input, shape index: {}]
  %s11 = inlined_call_operand.vmem [shape: bf16[64,16], index: 11, kind: input, shape index: {}]
  %s12 = inlined_call_operand.vmem [shape: f32[1,16], index: 12, kind: input, shape index: {}]
  %s13 = inlined_call_operand.vmem [shape: f32[4,16], index: 13, kind: input, shape index: {}]
  %s14 = inlined_call_operand.vmem [shape: f32[1,4], index: 14, kind: input, shape index: {}]
  %s15 = inlined_call_operand.vmem [shape: f32[1,4], index: 15, kind: input, shape index: {}]
  %s16 = inlined_call_operand.<no memory space> [shape: f32[1,1], index: 16, kind: input, shape index: {}]
  %s17 = inlined_call_operand.vmem [shape: f32[16,1], index: 17, kind: output, shape index: {0}]
  %s18 = inlined_call_operand.hbm [shape: f32[16,64], index: 18, kind: output, shape index: {1}]
  %19 = xla_tuple %s17, %s18
  %s20 = sld [smem:[#allocation0]]
  $region98: #{_forward.1} parent=0
    _
  %s22 = ssub.s32 1, %s20
  %s23 = scalar_select 0, %s22, %s20
  %v24 = vstv %s16
  %25 = vst [vmem:[#allocation2] sm:$0x1] %v24
  $region1: #{_forward.1} parent=0
    #allocation3 [shape = 'u8[32768]{0}', space=vmem, size = 0x8000, scoped, tag = 'input window, operand 4, single buffered']
    #allocation4 [shape = 's32[1]{0}', space=sflag, size = 0x4, scoped, tag = 'scoped memory for _forward.1']
    #allocation5 [shape = 's32[1]{0}', space=sflag, size = 0x4, scoped, tag = 'scoped memory for _forward.1']
    #allocation6 [shape = 'u8[32768]{0}', space=vmem, size = 0x8000, scoped, tag = 'input window, operand 5, single buffered']
    #allocation7 [shape = 's32[1]{0}', space=sflag, size = 0x4, scoped, tag = 'scoped memory for _forward.1']
    #allocation8 [shape = 'u8[16384]{0}', space=vmem, size = 0x4000, scoped, tag = 'input window, operand 9, single buffered']
    #allocation9 [shape = 'u8[8192]{0}', space=vmem, size = 0x2000, scoped, tag = 'output window, operand 1, single buffered']
    %26 = vsyncpa [#allocation4], 0
    %27 = vsyncpa [#allocation7], 0
    %28 = vsyncpa [#allocation5], 0
    // Predicated region
    $region2: #{_forward.1} parent=1 // pred_check
      _
    $region3: #{_forward.1} parent=1 // pred_check_branch
      %30 = sbr.rel (0) target = $region5
    $region4: #{_forward.1} parent=1 // pred_region
      _
    $region5: #{_forward.1} parent=1 // pred_fallthru
      _
    // Predicated region
    $region6: #{_forward.1} parent=1 // pred_check
      _
    $region7: #{_forward.1} parent=1 // pred_check_branch
      %32 = sbr.rel (0) target = $region9
    $region8: #{_forward.1} parent=1 // pred_region
      _
    $region9: #{_forward.1} parent=1 // pred_fallthru
      _
    // Predicated region
    $region10: #{_forward.1} parent=1 // pred_check
      _
    $region11: #{_forward.1} parent=1 // pred_check_branch
      %34 = sbr.rel (0) target = $region13
    $region12: #{_forward.1} parent=1 // pred_region
      _
    $region13: #{_forward.1} parent=1 // pred_fallthru
      _
    // Predicated region
    $region14: #{_forward.1} parent=1 // pred_check
      _
    $region15: #{_forward.1} parent=1 // pred_check_branch
      %36 = sbr.rel (0) target = $region17
    $region16: #{_forward.1} parent=1 // pred_region
      _
    $region17: #{_forward.1} parent=1 // pred_fallthru
      _
    // Predicated region
    $region18: #{_forward.1} parent=1 // pred_check
      _
    $region19: #{_forward.1} parent=1 // pred_check_branch
      %38 = sbr.rel (0) target = $region21
    $region20: #{_forward.1} parent=1 // pred_region
      %40 = vsyncadd [#allocation4], 0
      %s41 = sshll.u32 %s4, 4
      %s42 = int_to_ptr.hbm [resolvable:$true] %s41
      %s43 = sshll.u32 [#allocation3], 4
      %s44 = int_to_ptr.vmem [resolvable:$true] %s43
      %49 = dma.hbm_to_vmem [thread:$0]  %s42, 1024, %s44, [#allocation4], 128, 128, 8
    $region21: #{_forward.1} parent=1 // pred_fallthru
      _
    // Predicated region
    $region22: #{_forward.1} parent=1 // pred_check
      _
    $region23: #{_forward.1} parent=1 // pred_check_branch
      %51 = sbr.rel (0) target = $region25
    $region24: #{_forward.1} parent=1 // pred_region
      %53 = vsyncadd [#allocation7], 0
      %s54 = sshll.u32 %s5, 4
      %s55 = int_to_ptr.hbm [resolvable:$true] %s54
      %s56 = sshll.u32 [#allocation6], 4
      %s57 = int_to_ptr.vmem [resolvable:$true] %s56
      %62 = dma.hbm_to_vmem [thread:$0]  %s55, 1024, %s57, [#allocation7], 128, 128, 8
    $region25: #{_forward.1} parent=1 // pred_fallthru
      _
    // Predicated region
    $region26: #{_forward.1} parent=1 // pred_check
      _
    $region27: #{_forward.1} parent=1 // pred_check_branch
      %64 = sbr.rel (0) target = $region29
    $region28: #{_forward.1} parent=1 // pred_region
      _
    $region29: #{_forward.1} parent=1 // pred_fallthru
      _
    // Predicated region
    $region30: #{_forward.1} parent=1 // pred_check
      _
    $region31: #{_forward.1} parent=1 // pred_check_branch
      %66 = sbr.rel (0) target = $region33
    $region32: #{_forward.1} parent=1 // pred_region
      _
    $region33: #{_forward.1} parent=1 // pred_fallthru
      _
    // Predicated region
    $region34: #{_forward.1} parent=1 // pred_check
      _
    $region35: #{_forward.1} parent=1 // pred_check_branch
      %68 = sbr.rel (0) target = $region37
    $region36: #{_forward.1} parent=1 // pred_region
      _
    $region37: #{_forward.1} parent=1 // pred_fallthru
      _
    // Predicated region
    $region38: #{_forward.1} parent=1 // pred_check
      _
    $region39: #{_forward.1} parent=1 // pred_check_branch
      %70 = sbr.rel (0) target = $region41
    $region40: #{_forward.1} parent=1 // pred_region
      %72 = vsyncadd [#allocation7], 0
      %s73 = sshll.u32 %s9, 4
      %s74 = int_to_ptr.hbm [resolvable:$true] %s73
      %s75 = sshll.u32 [#allocation8], 4
      %s76 = int_to_ptr.vmem [resolvable:$true] %s75
      %81 = dma.hbm_to_vmem [thread:$0]  %s74, 512, %s76, [#allocation7], 64, 64, 4
    $region41: #{_forward.1} parent=1 // pred_fallthru
      _
    // Predicated region
    $region42: #{_forward.1} parent=1 // pred_check
      _
    $region43: #{_forward.1} parent=1 // pred_check_branch
      %83 = sbr.rel (0) target = $region45
    $region44: #{_forward.1} parent=1 // pred_region
      _
    $region45: #{_forward.1} parent=1 // pred_fallthru
      _
    // Predicated region
    $region46: #{_forward.1} parent=1 // pred_check
      _
    $region47: #{_forward.1} parent=1 // pred_check_branch
      %85 = sbr.rel (0) target = $region49
    $region48: #{_forward.1} parent=1 // pred_region
      _
    $region49: #{_forward.1} parent=1 // pred_fallthru
      _
    // Predicated region
    $region50: #{_forward.1} parent=1 // pred_check
      _
    $region51: #{_forward.1} parent=1 // pred_check_branch
      %87 = sbr.rel (0) target = $region53
    $region52: #{_forward.1} parent=1 // pred_region
      _
    $region53: #{_forward.1} parent=1 // pred_fallthru
      _
    // Predicated region
    $region54: #{_forward.1} parent=1 // pred_check
      _
    $region55: #{_forward.1} parent=1 // pred_check_branch
      %89 = sbr.rel (0) target = $region57
    $region56: #{_forward.1} parent=1 // pred_region
      _
    $region57: #{_forward.1} parent=1 // pred_fallthru
      _
    // Predicated region
    $region58: #{_forward.1} parent=1 // pred_check
      _
    $region59: #{_forward.1} parent=1 // pred_check_branch
      %91 = sbr.rel (0) target = $region61
    $region60: #{_forward.1} parent=1 // pred_region
      _
    $region61: #{_forward.1} parent=1 // pred_fallthru
      _
    // Predicated region
    $region62: #{_forward.1} parent=1 // pred_check
      _
    $region63: #{_forward.1} parent=1 // pred_check_branch
      %93 = sbr.rel (0) target = $region65
    $region64: #{_forward.1} parent=1 // pred_region
      _
    $region65: #{_forward.1} parent=1 // pred_fallthru
      _
    // Predicated region
    $region66: #{_forward.1} parent=1 // pred_check
      _
    $region67: #{_forward.1} parent=1 // pred_check_branch
      %95 = sbr.rel (0) target = $region69
    $region68: #{_forward.1} parent=1 // pred_region
      _
    $region69: #{_forward.1} parent=1 // pred_fallthru
      _
    // Predicated region
    $region70: #{_forward.1} parent=1 // pred_check
      _
    $region71: #{_forward.1} parent=1 // pred_check_branch
      %97 = sbr.rel (0) target = $region73
    $region72: #{_forward.1} parent=1 // pred_region
      %99 = dma.done [#allocation4], 1024
    $region73: #{_forward.1} parent=1 // pred_fallthru
      _
    // Predicated region
    $region74: #{_forward.1} parent=1 // pred_check
      _
    $region75: #{_forward.1} parent=1 // pred_check_branch
      %101 = sbr.rel (0) target = $region77
    $region76: #{_forward.1} parent=1 // pred_region
      %103 = dma.done [#allocation7], 1024
    $region77: #{_forward.1} parent=1 // pred_fallthru
      _
    // Predicated region
    $region78: #{_forward.1} parent=1 // pred_check
      _
    $region79: #{_forward.1} parent=1 // pred_check_branch
      %105 = sbr.rel (0) target = $region81
    $region80: #{_forward.1} parent=1 // pred_region
      %107 = dma.done [#allocation7], 512
    $region81: #{_forward.1} parent=1 // pred_fallthru
      _
    %v109 = vld [vmem:[%s2] sm:$0x1]
    %v110 = vld [vmem:[%s2 + $0x1] sm:$0x1]
    %v111 = vld [vmem:[%s3] sm:$0x1]
    %v112 = vld [vmem:[#allocation3] sm:$0xff]
    %v113 = vld [vmem:[#allocation3 + $0x8] sm:$0xff]
    %v114 = vld [vmem:[#allocation3 + $0x10] sm:$0xff]
    %v115 = vld [vmem:[#allocation3 + $0x18] sm:$0xff]
    %v116 = vld [vmem:[#allocation3 + $0x20] sm:$0xff]
    %v117 = vld [vmem:[#allocation3 + $0x28] sm:$0xff]
    %v118 = vld [vmem:[#allocation3 + $0x30] sm:$0xff]
    %v119 = vld [vmem:[#allocation3 + $0x38] sm:$0xff]
    %v120 = vld [vmem:[#allocation6] sm:$0xff]
    %v121 = vld [vmem:[#allocation6 + $0x8] sm:$0xff]
    %v122 = vld [vmem:[#allocation6 + $0x10] sm:$0xff]
    %v123 = vld [vmem:[#allocation6 + $0x18] sm:$0xff]
    %v124 = vld [vmem:[#allocation6 + $0x20] sm:$0xff]
    %v125 = vld [vmem:[#allocation6 + $0x28] sm:$0xff]
    %v126 = vld [vmem:[#allocation6 + $0x30] sm:$0xff]
    %v127 = vld [vmem:[#allocation6 + $0x38] sm:$0xff]
    %v128 = vld [vmem:[%s6] sm:$0x3]
    %v129 = vld [vmem:[%s0] sm:$0xf]
    %131 = vset.pattern.permute.xlu0 0
    %132 = vperm.xlu0 %131, %v129
    %v133 = vpop.permute.xlu0 %132
    %v135 = vperm.slane %v109, 0
    %v136 = vmul.f32 %v133, %v135
    %137 = vset.pattern.permute.xlu0 1
    %138 = vperm.xlu0 %137, %v129
    %v139 = vpop.permute.xlu0 %138
    %v141 = vperm.slane %v110, 0
    %v142 = vmul.f32 %v139, %v141
    %v143 = vadd.f32 %v136, %v142
    %v145 = vperm.slane %v111, 0
    %v147 = vadd.f32 %v143, %v145
    %v148 = vpack.c.bf16 %v147, %v147
    %v150 = vperm.slane %v128, 0
    %v151 = vperm.slane %v128, 1
    %v162 = vunpack.c.l.b16 %v112
    %v163 = vunpack.c.h.b16 %v112
    %v164 = vunpack.c.l.b16 %v113
    %v165 = vunpack.c.h.b16 %v113
    %v166 = vunpack.c.l.b16 %v114
    %v167 = vunpack.c.h.b16 %v114
    %v168 = vunpack.c.l.b16 %v115
    %v169 = vunpack.c.h.b16 %v115
    %v170 = vunpack.c.l.b16 %v116
    %v171 = vunpack.c.h.b16 %v116
    %v172 = vunpack.c.l.b16 %v117
    %v173 = vunpack.c.h.b16 %v117
    %v174 = vunpack.c.l.b16 %v118
    %v175 = vunpack.c.h.b16 %v118
    %v176 = vunpack.c.l.b16 %v119
    %v177 = vunpack.c.h.b16 %v119
    %v178 = vpack.c.b16 %v164, %v162
    %v179 = vpack.c.b16 %v165, %v163
    %v180 = vpack.c.b16 %v168, %v166
    %v181 = vpack.c.b16 %v169, %v167
    %v182 = vpack.c.b16 %v172, %v170
    %v183 = vpack.c.b16 %v173, %v171
    %v184 = vpack.c.b16 %v176, %v174
    %v185 = vpack.c.b16 %v177, %v175
    %vm194 = vcmask 523264
    %v196 = vsel %vm194, %v148, 0
    %198 = vmatpush.bf16.msra.mxu0 0
    %199 = vmatpush.bf16.msra.mxu0 0
    %200 = vmatpush.bf16.msra.mxu0 0
    %201 = vmatpush.bf16.msra.mxu0 0
    %202 = vmatpush.bf16.msra.mxu0 %v184
    %203 = vmatpush.bf16.msra.mxu0 %v182
    %204 = vmatpush.bf16.msra.mxu0 %v180
    %205 = vmatpush.bf16.msra.mxu0 %v178
    %206 = vmatmul.bf16.gmra.mxu0 %v196
    %v207 = vpop.f32.mrf.mxu0
    %v208 = vadd.f32 %v150, %v207
    %v209 = vpop.f32.mrf.mxu0
    %210 = vdwg.mxu0
    %211 = vmatpush.bf16.msra.mxu0 0
    %212 = vmatpush.bf16.msra.mxu0 0
    %213 = vmatpush.bf16.msra.mxu0 0
    %214 = vmatpush.bf16.msra.mxu0 0
    %215 = vmatpush.bf16.msra.mxu0 %v185
    %216 = vmatpush.bf16.msra.mxu0 %v183
    %217 = vmatpush.bf16.msra.mxu0 %v181
    %218 = vmatpush.bf16.msra.mxu0 %v179
    %219 = vmatmul.bf16.gmra.mxu0 %v196
    %v220 = vpop.f32.mrf.mxu0
    %v221 = vadd.f32 %v151, %v220
    %v222 = vpop.f32.mrf.mxu0
    %223 = vdwg.mxu0
    %v224 = vtanh.pop %v221
    %v225 = vxor.u32 %v221, 2147483648
    %v226 = vmul.f32 %v225, 1.442695
    %v227 = vpow.pop %v226
    %v228 = vadd.f32 %v227, 1.0
    %v229 = vrcp.pop %v228
    %v230 = vmul.f32 %v228, %v229
    %v231 = vsub.f32 1.0, %v230
    %v232 = vmul.f32 %v229, %v231
    %v233 = vadd.f32 %v229, %v232
    %vm234 = vweird.f32 %v228
    %vm235 = vweird.f32 %v229
    %vm236 = vmor %vm234, %vm235
    %v237 = vsel %vm236, %v229, %v233
    %v238 = vand.u32 2147483647, %v228
    %vm239 = vcmp.eq.f32.partialorder %v238, 8.507059e+37
    %v240 = vand.u32 %v228, 2147483648
    %v241 = vor.u32 1.1754944e-38, %v240
    %v242 = vsel %vm239, %v241, %v237
    %v243 = vmul.f32 1.0, %v242
    %v244 = vxor.u32 %v208, 2147483648
    %v245 = vmul.f32 %v244, 1.442695
    %v246 = vpow.pop %v245
    %v247 = vadd.f32 %v246, 1.0
    %v248 = vrcp.pop %v247
    %v249 = vmul.f32 %v247, %v248
    %v250 = vsub.f32 1.0, %v249
    %v251 = vmul.f32 %v248, %v250
    %v252 = vadd.f32 %v248, %v251
    %vm253 = vweird.f32 %v247
    %vm254 = vweird.f32 %v248
    %vm255 = vmor %vm253, %vm254
    %v256 = vsel %vm255, %v248, %v252
    %v257 = vand.u32 2147483647, %v247
    %vm258 = vcmp.eq.f32.partialorder %v257, 8.507059e+37
    %v259 = vand.u32 %v247, 2147483648
    %v260 = vor.u32 1.1754944e-38, %v259
    %v261 = vsel %vm258, %v260, %v256
    %v262 = vmul.f32 1.0, %v261
    %v263 = vmul.f32 %v262, %v224
    %v264 = vtanh.pop %v263
    %266 = vrot.lane.b32.xlu0 %v264, 64
    %v267 = vpop.permute.xlu0 %266
    %v269 = vmul.f32 %v243, %v267
    %v270 = vld [vmem:[%s0 + $0x4] sm:$0xf]
    %272 = vset.pattern.permute.xlu0 0
    %273 = vperm.xlu0 %272, %v270
    %v274 = vpop.permute.xlu0 %273
    %v276 = vmul.f32 %v274, %v135
    %277 = vset.pattern.permute.xlu0 1
    %278 = vperm.xlu0 %277, %v270
    %v279 = vpop.permute.xlu0 %278
    %v281 = vmul.f32 %v279, %v141
    %v282 = vadd.f32 %v276, %v281
    %v283 = vadd.f32 %v282, %v145
    %v284 = vpack.c.bf16 %v283, %v283
    %v286 = vsel %vm194, %v284, 0
    %288 = vmatpush.bf16.msra.mxu0 0
    %289 = vmatpush.bf16.msra.mxu0 0
    %290 = vmatpush.bf16.msra.mxu0 0
    %291 = vmatpush.bf16.msra.mxu0 0
    %292 = vmatpush.bf16.msra.mxu0 %v184
    %293 = vmatpush.bf16.msra.mxu0 %v182
    %294 = vmatpush.bf16.msra.mxu0 %v180
    %295 = vmatpush.bf16.msra.mxu0 %v178
    %296 = vmatmul.bf16.gmra.mxu0 %v286
    %v297 = vpop.f32.mrf.mxu0
    %v298 = vadd.f32 %v150, %v297
    %v299 = vpop.f32.mrf.mxu0
    %300 = vdwg.mxu0
    %301 = vmatpush.bf16.msra.mxu0 0
    %302 = vmatpush.bf16.msra.mxu0 0
    %303 = vmatpush.bf16.msra.mxu0 0
    %304 = vmatpush.bf16.msra.mxu0 0
    %305 = vmatpush.bf16.msra.mxu0 %v185
    %306 = vmatpush.bf16.msra.mxu0 %v183
    %307 = vmatpush.bf16.msra.mxu0 %v181
    %308 = vmatpush.bf16.msra.mxu0 %v179
    %309 = vmatmul.bf16.gmra.mxu0 %v286
    %v310 = vpop.f32.mrf.mxu0
    %v311 = vadd.f32 %v151, %v310
    %v312 = vpop.f32.mrf.mxu0
    %313 = vdwg.mxu0
    %v314 = vpack.c.bf16 %v269, %v269
    %316 = vrot.lane.b32.xlu0 %v314, 64
    %v317 = vpop.permute.xlu0 %316
    %v326 = vunpack.c.l.b16 %v120
    %v327 = vunpack.c.h.b16 %v120
    %v328 = vunpack.c.l.b16 %v121
    %v329 = vunpack.c.h.b16 %v121
    %v330 = vunpack.c.l.b16 %v122
    %v331 = vunpack.c.h.b16 %v122
    %v332 = vunpack.c.l.b16 %v123
    %v333 = vunpack.c.h.b16 %v123
    %v334 = vunpack.c.l.b16 %v124
    %v335 = vunpack.c.h.b16 %v124
    %v336 = vunpack.c.l.b16 %v125
    %v337 = vunpack.c.h.b16 %v125
    %v338 = vunpack.c.l.b16 %v126
    %v339 = vunpack.c.h.b16 %v126
    %v340 = vunpack.c.l.b16 %v127
    %v341 = vunpack.c.h.b16 %v127
    %v342 = vpack.c.b16 %v328, %v326
    %v343 = vpack.c.b16 %v329, %v327
    %v344 = vpack.c.b16 %v332, %v330
    %v345 = vpack.c.b16 %v333, %v331
    %v346 = vpack.c.b16 %v336, %v334
    %v347 = vpack.c.b16 %v337, %v335
    %v348 = vpack.c.b16 %v340, %v338
    %v349 = vpack.c.b16 %v341, %v339
    %v359 = vsel %vm194, %v317, 0
    %361 = vmatpush.bf16.msra.mxu0 0
    %362 = vmatpush.bf16.msra.mxu0 0
    %363 = vmatpush.bf16.msra.mxu0 0
    %364 = vmatpush.bf16.msra.mxu0 0
    %365 = vmatpush.bf16.msra.mxu0 %v348
    %366 = vmatpush.bf16.msra.mxu0 %v346
    %367 = vmatpush.bf16.msra.mxu0 %v344
    %368 = vmatpush.bf16.msra.mxu0 %v342
    %369 = vmatmul.bf16.gmra.mxu0 %v359
    %v370 = vpop.f32.mrf.mxu0
    %v371 = vadd.f32 0.0, %v370
    %v372 = vpop.f32.mrf.mxu0
    %373 = vdwg.mxu0
    %374 = vmatpush.bf16.msra.mxu0 0
    %375 = vmatpush.bf16.msra.mxu0 0
    %376 = vmatpush.bf16.msra.mxu0 0
    %377 = vmatpush.bf16.msra.mxu0 0
    %378 = vmatpush.bf16.msra.mxu0 %v349
    %379 = vmatpush.bf16.msra.mxu0 %v347
    %380 = vmatpush.bf16.msra.mxu0 %v345
    %381 = vmatpush.bf16.msra.mxu0 %v343
    %382 = vmatmul.bf16.gmra.mxu0 %v359
    %v383 = vpop.f32.mrf.mxu0
    %v384 = vadd.f32 0.0, %v383
    %v385 = vpop.f32.mrf.mxu0
    %386 = vdwg.mxu0
    %v387 = vadd.f32 %v298, %v371
    %v388 = vadd.f32 %v311, %v384
    %v389 = vtanh.pop %v388
    %v390 = vxor.u32 %v388, 2147483648
    %v391 = vmul.f32 %v390, 1.442695
    %v392 = vpow.pop %v391
    %v393 = vadd.f32 %v392, 1.0
    %v394 = vrcp.pop %v393
    %v395 = vmul.f32 %v393, %v394
    %v396 = vsub.f32 1.0, %v395
    %v397 = vmul.f32 %v394, %v396
    %v398 = vadd.f32 %v394, %v397
    %vm399 = vweird.f32 %v393
    %vm400 = vweird.f32 %v394
    %vm401 = vmor %vm399, %vm400
    %v402 = vsel %vm401, %v394, %v398
    %v403 = vand.u32 2147483647, %v393
    %vm404 = vcmp.eq.f32.partialorder %v403, 8.507059e+37
    %v405 = vand.u32 %v393, 2147483648
    %v406 = vor.u32 1.1754944e-38, %v405
    %v407 = vsel %vm404, %v406, %v402
    %v408 = vmul.f32 1.0, %v407
    %v409 = vxor.u32 %v387, 2147483648
    %v410 = vmul.f32 %v409, 1.442695
    %v411 = vpow.pop %v410
    %v412 = vadd.f32 %v411, 1.0
    %v413 = vrcp.pop %v412
    %v414 = vmul.f32 %v412, %v413
    %v415 = vsub.f32 1.0, %v414
    %v416 = vmul.f32 %v413, %v415
    %v417 = vadd.f32 %v413, %v416
    %vm418 = vweird.f32 %v412
    %vm419 = vweird.f32 %v413
    %vm420 = vmor %vm418, %vm419
    %v421 = vsel %vm420, %v413, %v417
    %v422 = vand.u32 2147483647, %v412
    %vm423 = vcmp.eq.f32.partialorder %v422, 8.507059e+37
    %v424 = vand.u32 %v412, 2147483648
    %v425 = vor.u32 1.1754944e-38, %v424
    %v426 = vsel %vm423, %v425, %v421
    %v427 = vmul.f32 1.0, %v426
    %429 = vrot.lane.b32.xlu0 %v263, 64
    %v430 = vpop.permute.xlu0 %429
    %v432 = vmul.f32 %v427, %v430
    %v433 = vmul.f32 %v427, %v389
    %435 = vrot.lane.b32.xlu0 %v433, 64
    %v436 = vpop.permute.xlu0 %435
    %v438 = vadd.f32 %v432, %v436
    %v439 = vtanh.pop %v438
    %v440 = vmul.f32 %v408, %v439
    %v441 = vld [vmem:[%s1] sm:$0xf]
    %v442 = vld [vmem:[%s7] sm:$0x1]
    %444 = vset.pattern.permute.xlu0 0
    %445 = vperm.xlu0 %444, %v441
    %v446 = vpop.permute.xlu0 %445
    %v448 = vperm.slane %v442, 0
    %v449 = vmul.f32 %v446, %v448
    %v450 = vld [vmem:[%s7 + $0x1] sm:$0x1]
    %451 = vset.pattern.permute.xlu0 1
    %452 = vperm.xlu0 %451, %v441
    %v453 = vpop.permute.xlu0 %452
    %v455 = vperm.slane %v450, 0
    %v456 = vmul.f32 %v453, %v455
    %v457 = vadd.f32 %v449, %v456
    %v458 = vpack.c.bf16 %v457, %v457
    %v459 = vld [vmem:[%s8] sm:$0xf]
    %v460 = vld [vmem:[%s8 + $0x4] sm:$0xf]
    %v461 = vld [vmem:[%s8 + $0x8] sm:$0xf]
    %v462 = vld [vmem:[%s8 + $0xc] sm:$0xf]
    %v463 = vld [vmem:[%s8 + $0x10] sm:$0xf]
    %v464 = vld [vmem:[%s8 + $0x14] sm:$0xf]
    %v465 = vld [vmem:[%s8 + $0x18] sm:$0xf]
    %v466 = vld [vmem:[%s8 + $0x1c] sm:$0xf]
    %v475 = vunpack.c.l.b16 %v459
    %v476 = vunpack.c.l.b16 %v460
    %v477 = vunpack.c.l.b16 %v461
    %v478 = vunpack.c.l.b16 %v462
    %v479 = vunpack.c.l.b16 %v463
    %v480 = vunpack.c.l.b16 %v464
    %v481 = vunpack.c.l.b16 %v465
    %v482 = vunpack.c.l.b16 %v466
    %v483 = vpack.c.b16 %v476, %v475
    %v484 = vpack.c.b16 %v478, %v477
    %v485 = vpack.c.b16 %v480, %v479
    %v486 = vpack.c.b16 %v482, %v481
    %v492 = vsel %vm194, %v458, 0
    %494 = vmatpush.bf16.msra.mxu0 0
    %495 = vmatpush.bf16.msra.mxu0 0
    %496 = vmatpush.bf16.msra.mxu0 0
    %497 = vmatpush.bf16.msra.mxu0 0
    %498 = vmatpush.bf16.msra.mxu0 %v486
    %499 = vmatpush.bf16.msra.mxu0 %v485
    %500 = vmatpush.bf16.msra.mxu0 %v484
    %501 = vmatpush.bf16.msra.mxu0 %v483
    %502 = vmatmul.bf16.gmra.mxu0 %v492
    %v503 = vpop.f32.mrf.mxu0
    %v504 = vadd.f32 0.0, %v503
    %v505 = vpop.f32.mrf.mxu0
    %506 = vdwg.mxu0
    %v507 = vpack.c.bf16 %v440, %v440
    %v508 = vld [vmem:[#allocation8] sm:$0xf]
    %v509 = vld [vmem:[#allocation8 + $0x4] sm:$0xf]
    %v510 = vld [vmem:[#allocation8 + $0x8] sm:$0xf]
    %v511 = vld [vmem:[#allocation8 + $0xc] sm:$0xf]
    %v512 = vld [vmem:[#allocation8 + $0x10] sm:$0xf]
    %v513 = vld [vmem:[#allocation8 + $0x14] sm:$0xf]
    %v514 = vld [vmem:[#allocation8 + $0x18] sm:$0xf]
    %v515 = vld [vmem:[#allocation8 + $0x1c] sm:$0xf]
    %517 = vrot.lane.b32.xlu0 %v507, 64
    %v518 = vpop.permute.xlu0 %517
    %v527 = vunpack.c.l.b16 %v508
    %v528 = vunpack.c.l.b16 %v509
    %v529 = vunpack.c.l.b16 %v510
    %v530 = vunpack.c.l.b16 %v511
    %v531 = vunpack.c.l.b16 %v512
    %v532 = vunpack.c.l.b16 %v513
    %v533 = vunpack.c.l.b16 %v514
    %v534 = vunpack.c.l.b16 %v515
    %v535 = vpack.c.b16 %v528, %v527
    %v536 = vpack.c.b16 %v530, %v529
    %v537 = vpack.c.b16 %v532, %v531
    %v538 = vpack.c.b16 %v534, %v533
    %v544 = vsel %vm194, %v518, 0
    %546 = vmatpush.bf16.msra.mxu0 0
    %547 = vmatpush.bf16.msra.mxu0 0
    %548 = vmatpush.bf16.msra.mxu0 0
    %549 = vmatpush.bf16.msra.mxu0 0
    %550 = vmatpush.bf16.msra.mxu0 %v538
    %551 = vmatpush.bf16.msra.mxu0 %v537
    %552 = vmatpush.bf16.msra.mxu0 %v536
    %553 = vmatpush.bf16.msra.mxu0 %v535
    %554 = vmatmul.bf16.gmra.mxu0 %v544
    %v555 = vpop.f32.mrf.mxu0
    %v556 = vadd.f32 0.0, %v555
    %v557 = vpop.f32.mrf.mxu0
    %558 = vdwg.mxu0
    %v559 = vadd.f32 %v504, %v556
    %v560 = vld [vmem:[%s10] sm:$0x1]
    %v562 = vperm.slane %v560, 0
    %v564 = vadd.f32 %v559, %v562
    %v565 = vld [vmem:[%s11] sm:$0xf]
    %v566 = vld [vmem:[%s11 + $0x4] sm:$0xf]
    %v567 = vld [vmem:[%s11 + $0x8] sm:$0xf]
    %v568 = vld [vmem:[%s11 + $0xc] sm:$0xf]
    %v569 = vld [vmem:[%s11 + $0x10] sm:$0xf]
    %v570 = vld [vmem:[%s11 + $0x14] sm:$0xf]
    %v571 = vld [vmem:[%s11 + $0x18] sm:$0xf]
    %v572 = vld [vmem:[%s11 + $0x1c] sm:$0xf]
    %v573 = vld [vmem:[%s12] sm:$0x1]
    %v574 = vld [vmem:[#allocation2] sm:$0x1]
    %v575 = vld [vmem:[%s13] sm:$0x1]
    %v576 = vld [vmem:[%s13 + $0x1] sm:$0x1]
    %v577 = vld [vmem:[%s13 + $0x2] sm:$0x1]
    %v578 = vld [vmem:[%s13 + $0x3] sm:$0x1]
    %v579 = vld [vmem:[%s14] sm:$0x1]
    %v580 = vld [vmem:[%s15] sm:$0x1]
    %v581 = vperm.slane %v504, 0
    %v582 = vsub.f32 %v564, %v581
    %v583 = vmax.f32 %v582, 0.0
    %v584 = vpack.c.bf16 %v583, %v583
    %v586 = vperm.slane %v573, 0
    %v596 = vunpack.c.l.b16 %v565
    %v597 = vunpack.c.l.b16 %v566
    %v598 = vunpack.c.l.b16 %v567
    %v599 = vunpack.c.l.b16 %v568
    %v600 = vunpack.c.l.b16 %v569
    %v601 = vunpack.c.l.b16 %v570
    %v602 = vunpack.c.l.b16 %v571
    %v603 = vunpack.c.l.b16 %v572
    %v604 = vpack.c.b16 %v597, %v596
    %v605 = vpack.c.b16 %v599, %v598
    %v606 = vpack.c.b16 %v601, %v600
    %v607 = vpack.c.b16 %v603, %v602
    %v613 = vsel %vm194, %v584, 0
    %615 = vmatpush.bf16.msra.mxu0 0
    %616 = vmatpush.bf16.msra.mxu0 0
    %617 = vmatpush.bf16.msra.mxu0 0
    %618 = vmatpush.bf16.msra.mxu0 0
    %619 = vmatpush.bf16.msra.mxu0 %v607
    %620 = vmatpush.bf16.msra.mxu0 %v606
    %621 = vmatpush.bf16.msra.mxu0 %v605
    %622 = vmatpush.bf16.msra.mxu0 %v604
    %623 = vmatmul.bf16.gmra.mxu0 %v613
    %v624 = vpop.f32.mrf.mxu0
    %v625 = vadd.f32 %v586, %v624
    %v626 = vpop.f32.mrf.mxu0
    %627 = vdwg.mxu0
    %v628 = vmax.f32 %v625, 0.0
    %v629 = vperm.slane %v575, 0
    %v630 = vmul.f32 %v628, %v629
    %vm631 = vcmask 125952
    %v632 = vsel %vm631, %v630, 0.0
    %633 = vadd.xlane.f32.xlu0 %v632
    %v634 = vpop.xlane.xlu0 %633
    %v636 = vperm.slane %v579, 0
    %v638 = vadd.f32 %v634, %v636
    %v639 = vmax.f32 %v638, 0.0
    %v641 = vperm.slane %v580, 0
    %v643 = vmul.f32 %v641, %v639
    %v644 = vadd.f32 %v643, 0.0
    %v645 = vperm.slane %v576, 0
    %v646 = vmul.f32 %v628, %v645
    %v647 = vsel %vm631, %v646, 0.0
    %648 = vadd.xlane.f32.xlu0 %v647
    %v649 = vpop.xlane.xlu0 %648
    %v650 = vadd.f32 %v649, %v636
    %v651 = vmax.f32 %v650, 0.0
    %v652 = vmul.f32 %v641, %v651
    %654 = vrot.lane.b32.xlu0 %v652, 127
    %v655 = vpop.permute.xlu0 %654
    %v657 = vadd.f32 %v644, %v655
    %v658 = vperm.slane %v577, 0
    %v659 = vmul.f32 %v628, %v658
    %v660 = vsel %vm631, %v659, 0.0
    %661 = vadd.xlane.f32.xlu0 %v660
    %v662 = vpop.xlane.xlu0 %661
    %v663 = vadd.f32 %v662, %v636
    %v664 = vmax.f32 %v663, 0.0
    %v665 = vmul.f32 %v641, %v664
    %667 = vrot.lane.b32.xlu0 %v665, 126
    %v668 = vpop.permute.xlu0 %667
    %v670 = vadd.f32 %v657, %v668
    %v671 = vperm.slane %v578, 0
    %v672 = vmul.f32 %v628, %v671
    %v673 = vsel %vm631, %v672, 0.0
    %674 = vadd.xlane.f32.xlu0 %v673
    %v675 = vpop.xlane.xlu0 %674
    %v676 = vadd.f32 %v675, %v636
    %v677 = vmax.f32 %v676, 0.0
    %v678 = vmul.f32 %v641, %v677
    %680 = vrot.lane.b32.xlu0 %v678, 125
    %v681 = vpop.permute.xlu0 %680
    %v683 = vadd.f32 %v670, %v681
    %v685 = vperm.slane %v574, 0
    %v687 = vadd.f32 %v683, %v685
    %vm688 = vcmask 3072
    %689 = vst.msk [vmem:[%s17] sm:$0xf] %vm688, %v687
    %691 = vrot.lane.b32.xlu0 %v440, 64
    %v692 = vpop.permute.xlu0 %691
    %vm694 = vcmask 519168
    %695 = vst.msk [vmem:[#allocation9] sm:$0xf] %vm694, %v692
    %v696 = vperm.slane %v504, 1
    %v697 = vsub.f32 %v564, %v696
    %v698 = vmax.f32 %v697, 0.0
    %v699 = vpack.c.bf16 %v698, %v698
    %v701 = vsel %vm194, %v699, 0
    %703 = vmatpush.bf16.msra.mxu0 0
    %704 = vmatpush.bf16.msra.mxu0 0
    %705 = vmatpush.bf16.msra.mxu0 0
    %706 = vmatpush.bf16.msra.mxu0 0
    %707 = vmatpush.bf16.msra.mxu0 %v607
    %708 = vmatpush.bf16.msra.mxu0 %v606
    %709 = vmatpush.bf16.msra.mxu0 %v605
    %710 = vmatpush.bf16.msra.mxu0 %v604
    %711 = vmatmul.bf16.gmra.mxu0 %v701
    %v712 = vpop.f32.mrf.mxu0
    %v713 = vadd.f32 %v586, %v712
    %v714 = vpop.f32.mrf.mxu0
    %715 = vdwg.mxu0
    %v716 = vmax.f32 %v713, 0.0
    %v717 = vmul.f32 %v716, %v629
    %v718 = vsel %vm631, %v717, 0.0
    %719 = vadd.xlane.f32.xlu0 %v718
    %v720 = vpop.xlane.xlu0 %719
    %v721 = vadd.f32 %v720, %v636
    %v722 = vmax.f32 %v721, 0.0
    %v723 = vmul.f32 %v641, %v722
    %v724 = vadd.f32 %v723, 0.0
    %v725 = vmul.f32 %v716, %v645
    %v726 = vsel %vm631, %v725, 0.0
    %727 = vadd.xlane.f32.xlu0 %v726
    %v728 = vpop.xlane.xlu0 %727
    %v729 = vadd.f32 %v728, %v636
    %v730 = vmax.f32 %v729, 0.0
    %v731 = vmul.f32 %v641, %v730
    %733 = vrot.lane.b32.xlu0 %v731, 127
    %v734 = vpop.permute.xlu0 %733
    %v736 = vadd.f32 %v724, %v734
    %v737 = vmul.f32 %v716, %v658
    %v738 = vsel %vm631, %v737, 0.0
    %739 = vadd.xlane.f32.xlu0 %v738
    %v740 = vpop.xlane.xlu0 %739
    %v741 = vadd.f32 %v740, %v636
    %v742 = vmax.f32 %v741, 0.0
    %v743 = vmul.f32 %v641, %v742
    %745 = vrot.lane.b32.xlu0 %v743, 126
    %v746 = vpop.permute.xlu0 %745
    %v748 = vadd.f32 %v736, %v746
    %v749 = vmul.f32 %v716, %v671
    %v750 = vsel %vm631, %v749, 0.0
    %751 = vadd.xlane.f32.xlu0 %v750
    %v752 = vpop.xlane.xlu0 %751
    %v753 = vadd.f32 %v752, %v636
    %v754 = vmax.f32 %v753, 0.0
    %v755 = vmul.f32 %v641, %v754
    %757 = vrot.lane.b32.xlu0 %v755, 125
    %v758 = vpop.permute.xlu0 %757
    %v760 = vadd.f32 %v748, %v758
    %v761 = vadd.f32 %v760, %v685
    %762 = vst.msk [vmem:[%s17 + $0x4] sm:$0xf] %vm688, %v761
    %763 = vst.msk [vmem:[#allocation9 + $0x4] sm:$0xf] %vm694, %v692
    %v764 = vperm.slane %v504, 2
    %v765 = vsub.f32 %v564, %v764
    %v766 = vmax.f32 %v765, 0.0
    %v767 = vpack.c.bf16 %v766, %v766
    %v769 = vsel %vm194, %v767, 0
    %771 = vmatpush.bf16.msra.mxu0 0
    %772 = vmatpush.bf16.msra.mxu0 0
    %773 = vmatpush.bf16.msra.mxu0 0
    %774 = vmatpush.bf16.msra.mxu0 0
    %775 = vmatpush.bf16.msra.mxu0 %v607
    %776 = vmatpush.bf16.msra.mxu0 %v606
    %777 = vmatpush.bf16.msra.mxu0 %v605
    %778 = vmatpush.bf16.msra.mxu0 %v604
    %779 = vmatmul.bf16.gmra.mxu0 %v769
    %v780 = vpop.f32.mrf.mxu0
    %v781 = vadd.f32 %v586, %v780
    %v782 = vpop.f32.mrf.mxu0
    %783 = vdwg.mxu0
    %v784 = vmax.f32 %v781, 0.0
    %v785 = vmul.f32 %v784, %v629
    %v786 = vsel %vm631, %v785, 0.0
    %787 = vadd.xlane.f32.xlu0 %v786
    %v788 = vpop.xlane.xlu0 %787
    %v789 = vadd.f32 %v788, %v636
    %v790 = vmax.f32 %v789, 0.0
    %v791 = vmul.f32 %v641, %v790
    %v792 = vadd.f32 %v791, 0.0
    %v793 = vmul.f32 %v784, %v645
    %v794 = vsel %vm631, %v793, 0.0
    %795 = vadd.xlane.f32.xlu0 %v794
    %v796 = vpop.xlane.xlu0 %795
    %v797 = vadd.f32 %v796, %v636
    %v798 = vmax.f32 %v797, 0.0
    %v799 = vmul.f32 %v641, %v798
    %801 = vrot.lane.b32.xlu0 %v799, 127
    %v802 = vpop.permute.xlu0 %801
    %v804 = vadd.f32 %v792, %v802
    %v805 = vmul.f32 %v784, %v658
    %v806 = vsel %vm631, %v805, 0.0
    %807 = vadd.xlane.f32.xlu0 %v806
    %v808 = vpop.xlane.xlu0 %807
    %v809 = vadd.f32 %v808, %v636
    %v810 = vmax.f32 %v809, 0.0
    %v811 = vmul.f32 %v641, %v810
    %813 = vrot.lane.b32.xlu0 %v811, 126
    %v814 = vpop.permute.xlu0 %813
    %v816 = vadd.f32 %v804, %v814
    %v817 = vmul.f32 %v784, %v671
    %v818 = vsel %vm631, %v817, 0.0
    %819 = vadd.xlane.f32.xlu0 %v818
    %v820 = vpop.xlane.xlu0 %819
    %v821 = vadd.f32 %v820, %v636
    %v822 = vmax.f32 %v821, 0.0
    %v823 = vmul.f32 %v641, %v822
    %825 = vrot.lane.b32.xlu0 %v823, 125
    %v826 = vpop.permute.xlu0 %825
    %v828 = vadd.f32 %v816, %v826
    %v829 = vadd.f32 %v828, %v685
    %830 = vst.msk [vmem:[%s17 + $0x8] sm:$0xf] %vm688, %v829
    %831 = vst.msk [vmem:[#allocation9 + $0x8] sm:$0xf] %vm694, %v692
    %v832 = vperm.slane %v504, 3
    %v833 = vsub.f32 %v564, %v832
    %v834 = vmax.f32 %v833, 0.0
    %v835 = vpack.c.bf16 %v834, %v834
    %v837 = vsel %vm194, %v835, 0
    %839 = vmatpush.bf16.msra.mxu0 0
    %840 = vmatpush.bf16.msra.mxu0 0
    %841 = vmatpush.bf16.msra.mxu0 0
    %842 = vmatpush.bf16.msra.mxu0 0
    %843 = vmatpush.bf16.msra.mxu0 %v607
    %844 = vmatpush.bf16.msra.mxu0 %v606
    %845 = vmatpush.bf16.msra.mxu0 %v605
    %846 = vmatpush.bf16.msra.mxu0 %v604
    %847 = vmatmul.bf16.gmra.mxu0 %v837
    %v848 = vpop.f32.mrf.mxu0
    %v849 = vadd.f32 %v586, %v848
    %v850 = vpop.f32.mrf.mxu0
    %851 = vdwg.mxu0
    %v852 = vmax.f32 %v849, 0.0
    %v853 = vmul.f32 %v852, %v629
    %v854 = vsel %vm631, %v853, 0.0
    %855 = vadd.xlane.f32.xlu0 %v854
    %v856 = vpop.xlane.xlu0 %855
    %v857 = vadd.f32 %v856, %v636
    %v858 = vmax.f32 %v857, 0.0
    %v859 = vmul.f32 %v641, %v858
    %v860 = vadd.f32 %v859, 0.0
    %v861 = vmul.f32 %v852, %v645
    %v862 = vsel %vm631, %v861, 0.0
    %863 = vadd.xlane.f32.xlu0 %v862
    %v864 = vpop.xlane.xlu0 %863
    %v865 = vadd.f32 %v864, %v636
    %v866 = vmax.f32 %v865, 0.0
    %v867 = vmul.f32 %v641, %v866
    %869 = vrot.lane.b32.xlu0 %v867, 127
    %v870 = vpop.permute.xlu0 %869
    %v872 = vadd.f32 %v860, %v870
    %v873 = vmul.f32 %v852, %v658
    %v874 = vsel %vm631, %v873, 0.0
    %875 = vadd.xlane.f32.xlu0 %v874
    %v876 = vpop.xlane.xlu0 %875
    %v877 = vadd.f32 %v876, %v636
    %v878 = vmax.f32 %v877, 0.0
    %v879 = vmul.f32 %v641, %v878
    %881 = vrot.lane.b32.xlu0 %v879, 126
    %v882 = vpop.permute.xlu0 %881
    %v884 = vadd.f32 %v872, %v882
    %v885 = vmul.f32 %v852, %v671
    %v886 = vsel %vm631, %v885, 0.0
    %887 = vadd.xlane.f32.xlu0 %v886
    %v888 = vpop.xlane.xlu0 %887
    %v889 = vadd.f32 %v888, %v636
    %v890 = vmax.f32 %v889, 0.0
    %v891 = vmul.f32 %v641, %v890
    %893 = vrot.lane.b32.xlu0 %v891, 125
    %v894 = vpop.permute.xlu0 %893
    %v896 = vadd.f32 %v884, %v894
    %v897 = vadd.f32 %v896, %v685
    %898 = vst.msk [vmem:[%s17 + $0xc] sm:$0xf] %vm688, %v897
    %899 = vst.msk [vmem:[#allocation9 + $0xc] sm:$0xf] %vm694, %v692
    // Predicated region
    $region82: #{_forward.1} parent=1 // pred_check
      _
    $region83: #{_forward.1} parent=1 // pred_check_branch
      %901 = sbr.rel (0) target = $region85
    $region84: #{_forward.1} parent=1 // pred_region
      _
    $region85: #{_forward.1} parent=1 // pred_fallthru
      _
    // Predicated region
    $region86: #{_forward.1} parent=1 // pred_check
      _
    $region87: #{_forward.1} parent=1 // pred_check_branch
      %903 = sbr.rel (0) target = $region89
    $region88: #{_forward.1} parent=1 // pred_region
      %905 = vsyncadd [#allocation5], 0
      %s906 = sshll.u32 [#allocation9], 4
      %s907 = int_to_ptr.vmem [resolvable:$true] %s906
      %s908 = sshll.u32 %s18, 4
      %s909 = int_to_ptr.hbm [resolvable:$true] %s908
      %914 = dma.vmem_to_hbm [thread:$0]  %s907, 256, %s909, [#allocation5], 128, 128, 8
    $region89: #{_forward.1} parent=1 // pred_fallthru
      _
    // Predicated region
    $region90: #{_forward.1} parent=1 // pred_check
      _
    $region91: #{_forward.1} parent=1 // pred_check_branch
      %916 = sbr.rel (0) target = $region93
    $region92: #{_forward.1} parent=1 // pred_region
      _
    $region93: #{_forward.1} parent=1 // pred_fallthru
      _
    // Predicated region
    $region94: #{_forward.1} parent=1 // pred_check
      _
    $region95: #{_forward.1} parent=1 // pred_check_branch
      %918 = sbr.rel (0) target = $region97
    $region96: #{_forward.1} parent=1 // pred_region
      %920 = dma.done [#allocation5], 256
    $region97: #{_forward.1} parent=1 // pred_fallthru
      _
    %921 = vsyncpa [#allocation4], 1
    %922 = vsyncpa [#allocation7], 1
    %923 = vsyncpa [#allocation5], 1

</llo_original>
